<compile_context>
chip_gen: v6e
topology: v6e:2x2x1
jax: 0.10.0
libtpu: 0.0.40
codegen_flags: <defaults>
</compile_context>

<pallas_src>
import functools

import jax
import jax.numpy as jnp
from jax.experimental import pallas as pl
from jax.experimental.pallas import tpu as pltpu


# ----------------------------------------------------------------------------
# Fused encoder kernel: one grid step = one batch element, all VMEM-resident.
# ----------------------------------------------------------------------------
def _mast_encoder_kernel(
    xp_ref, w_patch_ref, b_patch_ref,
    ln1_g_ref, ln1_b_ref,
    w_qkv_ref, b_qkv_ref,
    w_proj_ref, b_proj_ref,
    ln2_g_ref, ln2_b_ref,
    w_mlp1_ref, b_mlp1_ref,
    w_mlp2_ref, b_mlp2_ref,
    lnf_g_ref, lnf_b_ref,
    o_ref,
    kv_scr_ref,
    *, S, D, H, eps,
):
    d = D // H
    Sk = S // 2
    f32 = jnp.float32
    bf16 = jnp.bfloat16

    def layernorm(x, g, b):
        mu = jnp.mean(x, axis=-1, keepdims=True)
        xc = x - mu
        var = jnp.mean(xc * xc, axis=-1, keepdims=True)
        return (xc * jax.lax.rsqrt(var + eps)) * g + b

    def gelu(x):
        # tanh-approx GELU (EUP tanh; avoids erf lowering)
        return 0.5 * x * (1.0 + jnp.tanh(
            0.7978845608028654 * (x + 0.044715 * x * x * x)))

    def split_heads(x):
        # (T, D) -> (H, T, d): static lane slices + leading-axis stack (cheap,
        # avoids a major-dim transpose inside the kernel).
        return jnp.stack([x[:, h * d:(h + 1) * d] for h in range(H)], axis=0)

    # --- patch embedding: bf16 operands, f32 accumulation --------------------
    tok = jnp.dot(xp_ref[0], w_patch_ref[...],
                  preferred_element_type=f32) + b_patch_ref[...]          # (S, D)

    # --- attention block ------------------------------------------------------
    h1 = layernorm(tok, ln1_g_ref[...], ln1_b_ref[...])
    qkv = jnp.dot(h1.astype(bf16), w_qkv_ref[...],
                  preferred_element_type=f32) + b_qkv_ref[...]            # (S, 3D)

    scale = 1.0 / float(d) ** 0.5
    q = qkv[:, :D] * scale                                                # (S, D)

    # stride-2 K/V token pooling: park the packed K|V slab in VMEM scratch and
    # re-read even/odd rows with sublane-strided pl.ds, average on the VPU.
    kv_scr_ref[...] = qkv[:, D:]                                          # (S, 2D)
    kv_p = 0.5 * (kv_scr_ref[pl.ds(0, Sk, 2), :] +
                  kv_scr_ref[pl.ds(1, Sk, 2), :])                         # (Sk, 2D)
    k_p = kv_p[:, :D]
    v_p = kv_p[:, D:]

    # batched multi-head attention: one score + one PV contraction for all heads
    q3 = split_heads(q).astype(bf16)                                      # (H, S, d)
    k3 = split_heads(k_p).astype(bf16)                                    # (H, Sk, d)
    v3 = split_heads(v_p).astype(bf16)                                    # (H, Sk, d)
    s = jnp.einsum("hqd,hkd->hqk", q3, k3,
                   preferred_element_type=f32)                            # (H, S, Sk)
    m = jnp.max(s, axis=-1, keepdims=True)
    p = jnp.exp(s - m)
    p = p / jnp.sum(p, axis=-1, keepdims=True)                            # exact softmax
    o3 = jnp.einsum("hqk,hkd->hqd", p.astype(bf16), v3,
                    preferred_element_type=f32)                           # (H, S, d)
    attn = jnp.concatenate([o3[h] for h in range(H)], axis=-1)            # (S, D)

    proj = jnp.dot(attn.astype(bf16), w_proj_ref[...],
                   preferred_element_type=f32) + b_proj_ref[...]
    x1 = tok + proj

    # --- MLP block (hidden = 4D = 128 lanes, the lane-dense section) ---------
    h2 = layernorm(x1, ln2_g_ref[...], ln2_b_ref[...])
    m1 = gelu(jnp.dot(h2.astype(bf16), w_mlp1_ref[...],
                      preferred_element_type=f32) + b_mlp1_ref[...])
    m2 = jnp.dot(m1.astype(bf16), w_mlp2_ref[...],
                 preferred_element_type=f32) + b_mlp2_ref[...]
    x2 = x1 + m2

    # --- final LN + per-batch token mean (plain sublane reduce) ---------------
    z = layernorm(x2, lnf_g_ref[...], lnf_b_ref[...])                     # (S, D)
    o_ref[0] = jnp.mean(z, axis=0, keepdims=True).astype(o_ref.dtype)     # (1, D)


# ----------------------------------------------------------------------------
# Parameters (deterministic, synthetic).  Arrays only -- no Python ints.
# ----------------------------------------------------------------------------
def init_params(key, *, in_ch=1, patch=4, dim=32, mlp_ratio=4):
    ks = jax.random.split(key, 8)
    pdim = in_ch * patch * patch
    hidden = dim * mlp_ratio

    def w(k, shape, scale=0.05):
        return (scale * jax.random.normal(k, shape)).astype(jnp.float32)

    return dict(
        w_patch=w(ks[0], (pdim, dim)), b_patch=jnp.zeros((1, dim), jnp.float32),
        ln1_g=jnp.ones((1, dim), jnp.float32), ln1_b=jnp.zeros((1, dim), jnp.float32),
        w_qkv=w(ks[1], (dim, 3 * dim)), b_qkv=jnp.zeros((1, 3 * dim), jnp.float32),
        w_proj=w(ks[2], (dim, dim)), b_proj=jnp.zeros((1, dim), jnp.float32),
        ln2_g=jnp.ones((1, dim), jnp.float32), ln2_b=jnp.zeros((1, dim), jnp.float32),
        w_mlp1=w(ks[3], (dim, hidden)), b_mlp1=jnp.zeros((1, hidden), jnp.float32),
        w_mlp2=w(ks[4], (hidden, dim)), b_mlp2=jnp.zeros((1, dim), jnp.float32),
        lnf_g=jnp.ones((1, dim), jnp.float32), lnf_b=jnp.zeros((1, dim), jnp.float32),
    )


# ----------------------------------------------------------------------------
# Forward pass (static config bound via functools.partial, NOT traced)
# ----------------------------------------------------------------------------
def mast_forward(params, x, *, patch, dim, heads, mlp_ratio=4):
    """x: (B, C, F, T) float32 spectrogram (NCHW)."""
    B, C, F, T = x.shape
    P, D, H = patch, dim, heads
    Fp, Tp = F // P, T // P
    S = Fp * Tp
    Cpp = C * P * P
    Hid = D * mlp_ratio
    assert S % 2 == 0, "stride-2 K/V pooling requires an even token count"

    # non-overlapping PxP "conv" patchification == reshape + transpose (glue)
    # TODO(synk): fold this gather into the kernel DMA (BlockSpec index_map over
    #             (Fp, Tp) patch tiles) at production sizes to avoid the extra
    #             HBM round trip.
    xp = x.reshape(B, C, Fp, P, Tp, P).transpose(0, 2, 4, 1, 3, 5)
    xp = xp.reshape(B, S, Cpp).astype(jnp.bfloat16)

    bf16 = jnp.bfloat16
    w_patch = params["w_patch"].astype(bf16)
    w_qkv = params["w_qkv"].astype(bf16)
    w_proj = params["w_proj"].astype(bf16)
    w_mlp1 = params["w_mlp1"].astype(bf16)
    w_mlp2 = params["w_mlp2"].astype(bf16)

    kernel = functools.partial(_mast_encoder_kernel, S=S, D=D, H=H, eps=1e-5)

    def full(shape):
        return pl.BlockSpec(shape, lambda b: (0,) * len(shape))

    grid_spec = pltpu.PrefetchScalarGridSpec(
        num_scalar_prefetch=0,
        grid=(B,),
        in_specs=[
            pl.BlockSpec((1, S, Cpp), lambda b: (b, 0, 0)),   # xp (per batch)
            full((Cpp, D)), full((1, D)),                     # patch embed
            full((1, D)), full((1, D)),                       # ln1
            full((D, 3 * D)), full((1, 3 * D)),               # qkv
            full((D, D)), full((1, D)),                       # proj
            full((1, D)), full((1, D)),                       # ln2
            full((D, Hid)), full((1, Hid)),                   # mlp1
            full((Hid, D)), full((1, D)),                     # mlp2
            full((1, D)), full((1, D)),                       # final ln
        ],
        out_specs=pl.BlockSpec((1, 1, D), lambda b: (b, 0, 0)),
        scratch_shapes=[pltpu.VMEM((S, 2 * D), jnp.float32)],  # packed K|V slab
    )

    out = pl.pallas_call(
        kernel,
        out_shape=jax.ShapeDtypeStruct((B, 1, D), jnp.float32),
        grid_spec=grid_spec,
        compiler_params=pltpu.CompilerParams(
            dimension_semantics=("parallel",),   # batch axis -> both TCs on v7x
        ),
    )(
        xp,
        w_patch, params["b_patch"],
        params["ln1_g"], params["ln1_b"],
        w_qkv, params["b_qkv"],
        w_proj, params["b_proj"],
        params["ln2_g"], params["ln2_b"],
        w_mlp1, params["b_mlp1"],
        w_mlp2, params["b_mlp2"],
        params["lnf_g"], params["lnf_b"],
    )
    return out[:, 0, :]


# ----------------------------------------------------------------------------
if __name__ == "__main__":
    key = jax.random.PRNGKey(0)
    k_param, k_in = jax.random.split(key)

    PATCH, DIM, HEADS, IN_CH = 4, 32, 4, 1
    params = init_params(k_param, in_ch=IN_CH, patch=PATCH, dim=DIM)
    x = jax.random.normal(k_in, (2, IN_CH, 16, 16), dtype=jnp.float32)  # (B, C, F, T)

    fwd = jax.jit(functools.partial(mast_forward, patch=PATCH, dim=DIM, heads=HEADS))
    out = jax.block_until_ready(fwd(params, x))

    assert out.shape == (2, DIM) and out.dtype == jnp.float32
    assert bool(jnp.all(jnp.isfinite(out)))
    print("KERNEL_OK")
</pallas_src>

<mosaic_0001>
module attributes {stable_mosaic.version = 11 : i64} {
  func.func @_mast_encoder_kernel(%arg0: i32, %arg1: memref<1x16x16xbf16, #tpu.memory_space<vmem>>, %arg2: memref<16x32xbf16, #tpu.memory_space<vmem>>, %arg3: memref<1x32xf32, #tpu.memory_space<vmem>>, %arg4: memref<1x32xf32, #tpu.memory_space<vmem>>, %arg5: memref<1x32xf32, #tpu.memory_space<vmem>>, %arg6: memref<32x96xbf16, #tpu.memory_space<vmem>>, %arg7: memref<1x96xf32, #tpu.memory_space<vmem>>, %arg8: memref<32x32xbf16, #tpu.memory_space<vmem>>, %arg9: memref<1x32xf32, #tpu.memory_space<vmem>>, %arg10: memref<1x32xf32, #tpu.memory_space<vmem>>, %arg11: memref<1x32xf32, #tpu.memory_space<vmem>>, %arg12: memref<32x128xbf16, #tpu.memory_space<vmem>>, %arg13: memref<1x128xf32, #tpu.memory_space<vmem>>, %arg14: memref<128x32xbf16, #tpu.memory_space<vmem>>, %arg15: memref<1x32xf32, #tpu.memory_space<vmem>>, %arg16: memref<1x32xf32, #tpu.memory_space<vmem>>, %arg17: memref<1x32xf32, #tpu.memory_space<vmem>>, %arg18: memref<1x1x32xf32, #tpu.memory_space<vmem>>, %arg19: memref<16x64xf32, #tpu.memory_space<vmem>>) attributes {dimension_semantics = [#tpu.dimension_semantics<parallel>], iteration_bounds = array<i64: 2>, scalar_prefetch = 0 : i64, scratch_operands = 1 : i64, tpu.core_type = #tpu.core_type<tc>, window_params = [{transform_indices = @transform_0, window_bounds = array<i64: 1, 16, 16>}, {pipeline_mode = #tpu.pipeline_mode<synchronous>, transform_indices = @transform_1, window_bounds = array<i64: 16, 32>}, {pipeline_mode = #tpu.pipeline_mode<synchronous>, transform_indices = @transform_2, window_bounds = array<i64: 1, 32>}, {pipeline_mode = #tpu.pipeline_mode<synchronous>, transform_indices = @transform_3, window_bounds = array<i64: 1, 32>}, {pipeline_mode = #tpu.pipeline_mode<synchronous>, transform_indices = @transform_4, window_bounds = array<i64: 1, 32>}, {pipeline_mode = #tpu.pipeline_mode<synchronous>, transform_indices = @transform_5, window_bounds = array<i64: 32, 96>}, {pipeline_mode = #tpu.pipeline_mode<synchronous>, transform_indices = @transform_6, window_bounds = array<i64: 1, 96>}, {pipeline_mode = #tpu.pipeline_mode<synchronous>, transform_indices = @transform_7, window_bounds = array<i64: 32, 32>}, {pipeline_mode = #tpu.pipeline_mode<synchronous>, transform_indices = @transform_8, window_bounds = array<i64: 1, 32>}, {pipeline_mode = #tpu.pipeline_mode<synchronous>, transform_indices = @transform_9, window_bounds = array<i64: 1, 32>}, {pipeline_mode = #tpu.pipeline_mode<synchronous>, transform_indices = @transform_10, window_bounds = array<i64: 1, 32>}, {pipeline_mode = #tpu.pipeline_mode<synchronous>, transform_indices = @transform_11, window_bounds = array<i64: 32, 128>}, {pipeline_mode = #tpu.pipeline_mode<synchronous>, transform_indices = @transform_12, window_bounds = array<i64: 1, 128>}, {pipeline_mode = #tpu.pipeline_mode<synchronous>, transform_indices = @transform_13, window_bounds = array<i64: 128, 32>}, {pipeline_mode = #tpu.pipeline_mode<synchronous>, transform_indices = @transform_14, window_bounds = array<i64: 1, 32>}, {pipeline_mode = #tpu.pipeline_mode<synchronous>, transform_indices = @transform_15, window_bounds = array<i64: 1, 32>}, {pipeline_mode = #tpu.pipeline_mode<synchronous>, transform_indices = @transform_16, window_bounds = array<i64: 1, 32>}, {transform_indices = @transform_17, window_bounds = array<i64: 1, 1, 32>}]} {
    %c0 = arith.constant 0 : index
    %c0_0 = arith.constant 0 : index
    %c0_1 = arith.constant 0 : index
    %0 = vector.load %arg1[%c0, %c0_0, %c0_1] : memref<1x16x16xbf16, #tpu.memory_space<vmem>>, vector<1x16x16xbf16>
    %1 = vector.shape_cast %0 : vector<1x16x16xbf16> to vector<16x16xbf16>
    %c0_2 = arith.constant 0 : index
    %c0_3 = arith.constant 0 : index
    %2 = vector.load %arg2[%c0_2, %c0_3] : memref<16x32xbf16, #tpu.memory_space<vmem>>, vector<16x32xbf16>
    %cst = arith.constant dense<0.000000e+00> : vector<16x32xf32>
    %3 = tpu.matmul %1, %2, %cst {dimension_numbers = #tpu.dot_dimension_numbers<[1], [0], [0], [1], [0, 0, 1, 1], [], []>} : vector<16x16xbf16>, vector<16x32xbf16>, vector<16x32xf32> -> vector<16x32xf32>
    %c0_4 = arith.constant 0 : index
    %c0_5 = arith.constant 0 : index
    %4 = vector.load %arg3[%c0_4, %c0_5] : memref<1x32xf32, #tpu.memory_space<vmem>>, vector<1x32xf32>
    %5 = vector.broadcast %4 : vector<1x32xf32> to vector<16x32xf32>
    %6 = arith.addf %3, %5 : vector<16x32xf32>
    %c0_6 = arith.constant 0 : index
    %c0_7 = arith.constant 0 : index
    %7 = vector.load %arg4[%c0_6, %c0_7] : memref<1x32xf32, #tpu.memory_space<vmem>>, vector<1x32xf32>
    %c0_8 = arith.constant 0 : index
    %c0_9 = arith.constant 0 : index
    %8 = vector.load %arg5[%c0_8, %c0_9] : memref<1x32xf32, #tpu.memory_space<vmem>>, vector<1x32xf32>
    %cst_10 = arith.constant dense<0.000000e+00> : vector<16xf32>
    %9 = vector.multi_reduction <add>, %6, %cst_10 [1] : vector<16x32xf32> to vector<16xf32>
    %10 = vector.shape_cast %9 : vector<16xf32> to vector<16x1xf32>
    %cst_11 = arith.constant 3.200000e+01 : f32
    %11 = vector.broadcast %cst_11 : f32 to vector<16x1xf32>
    %12 = arith.divf %10, %11 : vector<16x1xf32>
    %13 = vector.broadcast %12 : vector<16x1xf32> to vector<16x32xf32>
    %14 = arith.subf %6, %13 : vector<16x32xf32>
    %15 = arith.mulf %14, %14 : vector<16x32xf32>
    %cst_12 = arith.constant dense<0.000000e+00> : vector<16xf32>
    %16 = vector.multi_reduction <add>, %15, %cst_12 [1] : vector<16x32xf32> to vector<16xf32>
    %17 = vector.shape_cast %16 : vector<16xf32> to vector<16x1xf32>
    %cst_13 = arith.constant 3.200000e+01 : f32
    %18 = vector.broadcast %cst_13 : f32 to vector<16x1xf32>
    %19 = arith.divf %17, %18 : vector<16x1xf32>
    %cst_14 = arith.constant 9.99999974E-6 : f32
    %20 = vector.broadcast %cst_14 : f32 to vector<16x1xf32>
    %21 = arith.addf %19, %20 : vector<16x1xf32>
    %22 = math.rsqrt %21 : vector<16x1xf32>
    %23 = vector.broadcast %22 : vector<16x1xf32> to vector<16x32xf32>
    %24 = arith.mulf %14, %23 : vector<16x32xf32>
    %25 = vector.broadcast %7 : vector<1x32xf32> to vector<16x32xf32>
    %26 = arith.mulf %24, %25 : vector<16x32xf32>
    %27 = vector.broadcast %8 : vector<1x32xf32> to vector<16x32xf32>
    %28 = arith.addf %26, %27 : vector<16x32xf32>
    %29 = arith.truncf %28 : vector<16x32xf32> to vector<16x32xbf16>
    %c0_15 = arith.constant 0 : index
    %c0_16 = arith.constant 0 : index
    %30 = vector.load %arg6[%c0_15, %c0_16] : memref<32x96xbf16, #tpu.memory_space<vmem>>, vector<32x96xbf16>
    %cst_17 = arith.constant dense<0.000000e+00> : vector<16x96xf32>
    %31 = tpu.matmul %29, %30, %cst_17 {dimension_numbers = #tpu.dot_dimension_numbers<[1], [0], [0], [1], [0, 0, 1, 1], [], []>} : vector<16x32xbf16>, vector<32x96xbf16>, vector<16x96xf32> -> vector<16x96xf32>
    %c0_18 = arith.constant 0 : index
    %c0_19 = arith.constant 0 : index
    %32 = vector.load %arg7[%c0_18, %c0_19] : memref<1x96xf32, #tpu.memory_space<vmem>>, vector<1x96xf32>
    %33 = vector.broadcast %32 : vector<1x96xf32> to vector<16x96xf32>
    %34 = arith.addf %31, %33 : vector<16x96xf32>
    %35 = vector.extract_strided_slice %34 {offsets = [0, 0], sizes = [16, 32], strides = [1, 1]} : vector<16x96xf32> to vector<16x32xf32>
    %cst_20 = arith.constant 0.353553385 : f32
    %36 = vector.broadcast %cst_20 : f32 to vector<16x32xf32>
    %37 = arith.mulf %35, %36 : vector<16x32xf32>
    %38 = vector.extract_strided_slice %34 {offsets = [0, 32], sizes = [16, 64], strides = [1, 1]} : vector<16x96xf32> to vector<16x64xf32>
    %c0_21 = arith.constant 0 : index
    %c0_22 = arith.constant 0 : index
    %39 = vector.load %arg19[%c0_21, %c0_22] : memref<16x64xf32, #tpu.memory_space<vmem>>, vector<16x64xf32>
    tpu.vector_store %arg19[%c0_21, %c0_22], %38 {strides = array<i32>} : memref<16x64xf32, #tpu.memory_space<vmem>>, vector<16x64xf32>,
    %c0_23 = arith.constant 0 : index
    %c0_24 = arith.constant 0 : index
    %40 = tpu.strided_load %arg19[%c0_23, %c0_24] {strides = array<i32: 2, 1>} : memref<16x64xf32, #tpu.memory_space<vmem>>, vector<8x64xf32>
    %c1 = arith.constant 1 : index
    %c0_25 = arith.constant 0 : index
    %41 = tpu.strided_load %arg19[%c1, %c0_25] {strides = array<i32: 2, 1>} : memref<16x64xf32, #tpu.memory_space<vmem>>, vector<8x64xf32>
    %42 = arith.addf %40, %41 : vector<8x64xf32>
    %cst_26 = arith.constant 5.000000e-01 : f32
    %43 = vector.broadcast %cst_26 : f32 to vector<8x64xf32>
    %44 = arith.mulf %43, %42 : vector<8x64xf32>
    %45 = vector.extract_strided_slice %44 {offsets = [0, 0], sizes = [8, 32], strides = [1, 1]} : vector<8x64xf32> to vector<8x32xf32>
    %46 = vector.extract_strided_slice %44 {offsets = [0, 32], sizes = [8, 32], strides = [1, 1]} : vector<8x64xf32> to vector<8x32xf32>
    %47 = vector.extract_strided_slice %37 {offsets = [0, 0], sizes = [16, 8], strides = [1, 1]} : vector<16x32xf32> to vector<16x8xf32>
    %48 = vector.extract_strided_slice %37 {offsets = [0, 8], sizes = [16, 8], strides = [1, 1]} : vector<16x32xf32> to vector<16x8xf32>
    %49 = vector.extract_strided_slice %37 {offsets = [0, 16], sizes = [16, 8], strides = [1, 1]} : vector<16x32xf32> to vector<16x8xf32>
    %50 = vector.extract_strided_slice %37 {offsets = [0, 24], sizes = [16, 8], strides = [1, 1]} : vector<16x32xf32> to vector<16x8xf32>
    %51 = vector.shape_cast %47 : vector<16x8xf32> to vector<1x16x8xf32>
    %52 = vector.shape_cast %48 : vector<16x8xf32> to vector<1x16x8xf32>
    %53 = vector.shape_cast %49 : vector<16x8xf32> to vector<1x16x8xf32>
    %54 = vector.shape_cast %50 : vector<16x8xf32> to vector<1x16x8xf32>
    %55 = tpu.concatenate %51, %52, %53, %54 in 0 : vector<1x16x8xf32>, vector<1x16x8xf32>, vector<1x16x8xf32>, vector<1x16x8xf32> -> vector<4x16x8xf32>
    %56 = arith.truncf %55 : vector<4x16x8xf32> to vector<4x16x8xbf16>
    %57 = vector.extract_strided_slice %45 {offsets = [0, 0], sizes = [8, 8], strides = [1, 1]} : vector<8x32xf32> to vector<8x8xf32>
    %58 = vector.extract_strided_slice %45 {offsets = [0, 8], sizes = [8, 8], strides = [1, 1]} : vector<8x32xf32> to vector<8x8xf32>
    %59 = vector.extract_strided_slice %45 {offsets = [0, 16], sizes = [8, 8], strides = [1, 1]} : vector<8x32xf32> to vector<8x8xf32>
    %60 = vector.extract_strided_slice %45 {offsets = [0, 24], sizes = [8, 8], strides = [1, 1]} : vector<8x32xf32> to vector<8x8xf32>
    %61 = vector.shape_cast %57 : vector<8x8xf32> to vector<1x8x8xf32>
    %62 = vector.shape_cast %58 : vector<8x8xf32> to vector<1x8x8xf32>
    %63 = vector.shape_cast %59 : vector<8x8xf32> to vector<1x8x8xf32>
    %64 = vector.shape_cast %60 : vector<8x8xf32> to vector<1x8x8xf32>
    %65 = tpu.concatenate %61, %62, %63, %64 in 0 : vector<1x8x8xf32>, vector<1x8x8xf32>, vector<1x8x8xf32>, vector<1x8x8xf32> -> vector<4x8x8xf32>
    %66 = arith.truncf %65 : vector<4x8x8xf32> to vector<4x8x8xbf16>
    %67 = vector.extract_strided_slice %46 {offsets = [0, 0], sizes = [8, 8], strides = [1, 1]} : vector<8x32xf32> to vector<8x8xf32>
    %68 = vector.extract_strided_slice %46 {offsets = [0, 8], sizes = [8, 8], strides = [1, 1]} : vector<8x32xf32> to vector<8x8xf32>
    %69 = vector.extract_strided_slice %46 {offsets = [0, 16], sizes = [8, 8], strides = [1, 1]} : vector<8x32xf32> to vector<8x8xf32>
    %70 = vector.extract_strided_slice %46 {offsets = [0, 24], sizes = [8, 8], strides = [1, 1]} : vector<8x32xf32> to vector<8x8xf32>
    %71 = vector.shape_cast %67 : vector<8x8xf32> to vector<1x8x8xf32>
    %72 = vector.shape_cast %68 : vector<8x8xf32> to vector<1x8x8xf32>
    %73 = vector.shape_cast %69 : vector<8x8xf32> to vector<1x8x8xf32>
    %74 = vector.shape_cast %70 : vector<8x8xf32> to vector<1x8x8xf32>
    %75 = tpu.concatenate %71, %72, %73, %74 in 0 : vector<1x8x8xf32>, vector<1x8x8xf32>, vector<1x8x8xf32>, vector<1x8x8xf32> -> vector<4x8x8xf32>
    %76 = arith.truncf %75 : vector<4x8x8xf32> to vector<4x8x8xbf16>
    "tpu.trace_start"() <{level = 10 : i32, message = "hqd,hkd->hqk"}> : () -> ()
    %cst_27 = arith.constant dense<0.000000e+00> : vector<4x16x8xf32>
    %77 = tpu.matmul %56, %66, %cst_27 {dimension_numbers = #tpu.dot_dimension_numbers<[2], [2], [1], [1], [0, 0, 0, 1, 1, 1], [0], [0]>} : vector<4x16x8xbf16>, vector<4x8x8xbf16>, vector<4x16x8xf32> -> vector<4x16x8xf32>
    "tpu.trace_stop"() : () -> ()
    %cst_28 = arith.constant dense<0xFF800000> : vector<4x16xf32>
    %78 = vector.multi_reduction <maximumf>, %77, %cst_28 [2] : vector<4x16x8xf32> to vector<4x16xf32>
    %79 = vector.shape_cast %78 : vector<4x16xf32> to vector<4x16x1xf32>
    %80 = vector.broadcast %79 : vector<4x16x1xf32> to vector<4x16x8xf32>
    %81 = arith.subf %77, %80 : vector<4x16x8xf32>
    %82 = math.exp %81 : vector<4x16x8xf32>
    %cst_29 = arith.constant dense<0.000000e+00> : vector<4x16xf32>
    %83 = vector.multi_reduction <add>, %82, %cst_29 [2] : vector<4x16x8xf32> to vector<4x16xf32>
    %84 = vector.shape_cast %83 : vector<4x16xf32> to vector<4x16x1xf32>
    %85 = vector.broadcast %84 : vector<4x16x1xf32> to vector<4x16x8xf32>
    %86 = arith.divf %82, %85 : vector<4x16x8xf32>
    %87 = arith.truncf %86 : vector<4x16x8xf32> to vector<4x16x8xbf16>
    "tpu.trace_start"() <{level = 10 : i32, message = "hqk,hkd->hqd"}> : () -> ()
    %cst_30 = arith.constant dense<0.000000e+00> : vector<4x16x8xf32>
    %88 = tpu.matmul %87, %76, %cst_30 {dimension_numbers = #tpu.dot_dimension_numbers<[2], [1], [1], [2], [0, 0, 0, 1, 1, 2], [0], [0]>} : vector<4x16x8xbf16>, vector<4x8x8xbf16>, vector<4x16x8xf32> -> vector<4x16x8xf32>
    "tpu.trace_stop"() : () -> ()
    %89 = vector.extract_strided_slice %88 {offsets = [0, 0, 0], sizes = [1, 16, 8], strides = [1, 1, 1]} : vector<4x16x8xf32> to vector<1x16x8xf32>
    %90 = vector.shape_cast %89 : vector<1x16x8xf32> to vector<16x8xf32>
    %91 = vector.extract_strided_slice %88 {offsets = [1, 0, 0], sizes = [1, 16, 8], strides = [1, 1, 1]} : vector<4x16x8xf32> to vector<1x16x8xf32>
    %92 = vector.shape_cast %91 : vector<1x16x8xf32> to vector<16x8xf32>
    %93 = vector.extract_strided_slice %88 {offsets = [2, 0, 0], sizes = [1, 16, 8], strides = [1, 1, 1]} : vector<4x16x8xf32> to vector<1x16x8xf32>
    %94 = vector.shape_cast %93 : vector<1x16x8xf32> to vector<16x8xf32>
    %95 = vector.extract_strided_slice %88 {offsets = [3, 0, 0], sizes = [1, 16, 8], strides = [1, 1, 1]} : vector<4x16x8xf32> to vector<1x16x8xf32>
    %96 = vector.shape_cast %95 : vector<1x16x8xf32> to vector<16x8xf32>
    %97 = tpu.concatenate %90, %92, %94, %96 in 1 : vector<16x8xf32>, vector<16x8xf32>, vector<16x8xf32>, vector<16x8xf32> -> vector<16x32xf32>
    %98 = arith.truncf %97 : vector<16x32xf32> to vector<16x32xbf16>
    %c0_31 = arith.constant 0 : index
    %c0_32 = arith.constant 0 : index
    %99 = vector.load %arg8[%c0_31, %c0_32] : memref<32x32xbf16, #tpu.memory_space<vmem>>, vector<32x32xbf16>
    %cst_33 = arith.constant dense<0.000000e+00> : vector<16x32xf32>
    %100 = tpu.matmul %98, %99, %cst_33 {dimension_numbers = #tpu.dot_dimension_numbers<[1], [0], [0], [1], [0, 0, 1, 1], [], []>} : vector<16x32xbf16>, vector<32x32xbf16>, vector<16x32xf32> -> vector<16x32xf32>
    %c0_34 = arith.constant 0 : index
    %c0_35 = arith.constant 0 : index
    %101 = vector.load %arg9[%c0_34, %c0_35] : memref<1x32xf32, #tpu.memory_space<vmem>>, vector<1x32xf32>
    %102 = vector.broadcast %101 : vector<1x32xf32> to vector<16x32xf32>
    %103 = arith.addf %100, %102 : vector<16x32xf32>
    %104 = arith.addf %6, %103 : vector<16x32xf32>
    %c0_36 = arith.constant 0 : index
    %c0_37 = arith.constant 0 : index
    %105 = vector.load %arg10[%c0_36, %c0_37] : memref<1x32xf32, #tpu.memory_space<vmem>>, vector<1x32xf32>
    %c0_38 = arith.constant 0 : index
    %c0_39 = arith.constant 0 : index
    %106 = vector.load %arg11[%c0_38, %c0_39] : memref<1x32xf32, #tpu.memory_space<vmem>>, vector<1x32xf32>
    %cst_40 = arith.constant dense<0.000000e+00> : vector<16xf32>
    %107 = vector.multi_reduction <add>, %104, %cst_40 [1] : vector<16x32xf32> to vector<16xf32>
    %108 = vector.shape_cast %107 : vector<16xf32> to vector<16x1xf32>
    %cst_41 = arith.constant 3.200000e+01 : f32
    %109 = vector.broadcast %cst_41 : f32 to vector<16x1xf32>
    %110 = arith.divf %108, %109 : vector<16x1xf32>
    %111 = vector.broadcast %110 : vector<16x1xf32> to vector<16x32xf32>
    %112 = arith.subf %104, %111 : vector<16x32xf32>
    %113 = arith.mulf %112, %112 : vector<16x32xf32>
    %cst_42 = arith.constant dense<0.000000e+00> : vector<16xf32>
    %114 = vector.multi_reduction <add>, %113, %cst_42 [1] : vector<16x32xf32> to vector<16xf32>
    %115 = vector.shape_cast %114 : vector<16xf32> to vector<16x1xf32>
    %cst_43 = arith.constant 3.200000e+01 : f32
    %116 = vector.broadcast %cst_43 : f32 to vector<16x1xf32>
    %117 = arith.divf %115, %116 : vector<16x1xf32>
    %cst_44 = arith.constant 9.99999974E-6 : f32
    %118 = vector.broadcast %cst_44 : f32 to vector<16x1xf32>
    %119 = arith.addf %117, %118 : vector<16x1xf32>
    %120 = math.rsqrt %119 : vector<16x1xf32>
    %121 = vector.broadcast %120 : vector<16x1xf32> to vector<16x32xf32>
    %122 = arith.mulf %112, %121 : vector<16x32xf32>
    %123 = vector.broadcast %105 : vector<1x32xf32> to vector<16x32xf32>
    %124 = arith.mulf %122, %123 : vector<16x32xf32>
    %125 = vector.broadcast %106 : vector<1x32xf32> to vector<16x32xf32>
    %126 = arith.addf %124, %125 : vector<16x32xf32>
    %127 = arith.truncf %126 : vector<16x32xf32> to vector<16x32xbf16>
    %c0_45 = arith.constant 0 : index
    %c0_46 = arith.constant 0 : index
    %128 = vector.load %arg12[%c0_45, %c0_46] : memref<32x128xbf16, #tpu.memory_space<vmem>>, vector<32x128xbf16>
    %cst_47 = arith.constant dense<0.000000e+00> : vector<16x128xf32>
    %129 = tpu.matmul %127, %128, %cst_47 {dimension_numbers = #tpu.dot_dimension_numbers<[1], [0], [0], [1], [0, 0, 1, 1], [], []>} : vector<16x32xbf16>, vector<32x128xbf16>, vector<16x128xf32> -> vector<16x128xf32>
    %c0_48 = arith.constant 0 : index
    %c0_49 = arith.constant 0 : index
    %130 = vector.load %arg13[%c0_48, %c0_49] : memref<1x128xf32, #tpu.memory_space<vmem>>, vector<1x128xf32>
    %131 = vector.broadcast %130 : vector<1x128xf32> to vector<16x128xf32>
    %132 = arith.addf %129, %131 : vector<16x128xf32>
    %cst_50 = arith.constant 5.000000e-01 : f32
    %133 = vector.broadcast %cst_50 : f32 to vector<16x128xf32>
    %134 = arith.mulf %133, %132 : vector<16x128xf32>
    %cst_51 = arith.constant 4.471500e-02 : f32
    %135 = vector.broadcast %cst_51 : f32 to vector<16x128xf32>
    %136 = arith.mulf %135, %132 : vector<16x128xf32>
    %137 = arith.mulf %136, %132 : vector<16x128xf32>
    %138 = arith.mulf %137, %132 : vector<16x128xf32>
    %139 = arith.addf %132, %138 : vector<16x128xf32>
    %cst_52 = arith.constant 0.797884583 : f32
    %140 = vector.broadcast %cst_52 : f32 to vector<16x128xf32>
    %141 = arith.mulf %140, %139 : vector<16x128xf32>
    %142 = math.tanh %141 : vector<16x128xf32>
    %cst_53 = arith.constant 1.000000e+00 : f32
    %143 = vector.broadcast %cst_53 : f32 to vector<16x128xf32>
    %144 = arith.addf %143, %142 : vector<16x128xf32>
    %145 = arith.mulf %134, %144 : vector<16x128xf32>
    %146 = arith.truncf %145 : vector<16x128xf32> to vector<16x128xbf16>
    %c0_54 = arith.constant 0 : index
    %c0_55 = arith.constant 0 : index
    %147 = vector.load %arg14[%c0_54, %c0_55] : memref<128x32xbf16, #tpu.memory_space<vmem>>, vector<128x32xbf16>
    %cst_56 = arith.constant dense<0.000000e+00> : vector<16x32xf32>
    %148 = tpu.matmul %146, %147, %cst_56 {dimension_numbers = #tpu.dot_dimension_numbers<[1], [0], [0], [1], [0, 0, 1, 1], [], []>} : vector<16x128xbf16>, vector<128x32xbf16>, vector<16x32xf32> -> vector<16x32xf32>
    %c0_57 = arith.constant 0 : index
    %c0_58 = arith.constant 0 : index
    %149 = vector.load %arg15[%c0_57, %c0_58] : memref<1x32xf32, #tpu.memory_space<vmem>>, vector<1x32xf32>
    %150 = vector.broadcast %149 : vector<1x32xf32> to vector<16x32xf32>
    %151 = arith.addf %148, %150 : vector<16x32xf32>
    %152 = arith.addf %104, %151 : vector<16x32xf32>
    %c0_59 = arith.constant 0 : index
    %c0_60 = arith.constant 0 : index
    %153 = vector.load %arg16[%c0_59, %c0_60] : memref<1x32xf32, #tpu.memory_space<vmem>>, vector<1x32xf32>
    %c0_61 = arith.constant 0 : index
    %c0_62 = arith.constant 0 : index
    %154 = vector.load %arg17[%c0_61, %c0_62] : memref<1x32xf32, #tpu.memory_space<vmem>>, vector<1x32xf32>
    %cst_63 = arith.constant dense<0.000000e+00> : vector<16xf32>
    %155 = vector.multi_reduction <add>, %152, %cst_63 [1] : vector<16x32xf32> to vector<16xf32>
    %156 = vector.shape_cast %155 : vector<16xf32> to vector<16x1xf32>
    %cst_64 = arith.constant 3.200000e+01 : f32
    %157 = vector.broadcast %cst_64 : f32 to vector<16x1xf32>
    %158 = arith.divf %156, %157 : vector<16x1xf32>
    %159 = vector.broadcast %158 : vector<16x1xf32> to vector<16x32xf32>
    %160 = arith.subf %152, %159 : vector<16x32xf32>
    %161 = arith.mulf %160, %160 : vector<16x32xf32>
    %cst_65 = arith.constant dense<0.000000e+00> : vector<16xf32>
    %162 = vector.multi_reduction <add>, %161, %cst_65 [1] : vector<16x32xf32> to vector<16xf32>
    %163 = vector.shape_cast %162 : vector<16xf32> to vector<16x1xf32>
    %cst_66 = arith.constant 3.200000e+01 : f32
    %164 = vector.broadcast %cst_66 : f32 to vector<16x1xf32>
    %165 = arith.divf %163, %164 : vector<16x1xf32>
    %cst_67 = arith.constant 9.99999974E-6 : f32
    %166 = vector.broadcast %cst_67 : f32 to vector<16x1xf32>
    %167 = arith.addf %165, %166 : vector<16x1xf32>
    %168 = math.rsqrt %167 : vector<16x1xf32>
    %169 = vector.broadcast %168 : vector<16x1xf32> to vector<16x32xf32>
    %170 = arith.mulf %160, %169 : vector<16x32xf32>
    %171 = vector.broadcast %153 : vector<1x32xf32> to vector<16x32xf32>
    %172 = arith.mulf %170, %171 : vector<16x32xf32>
    %173 = vector.broadcast %154 : vector<1x32xf32> to vector<16x32xf32>
    %174 = arith.addf %172, %173 : vector<16x32xf32>
    %cst_68 = arith.constant dense<0.000000e+00> : vector<32xf32>
    %175 = vector.multi_reduction <add>, %174, %cst_68 [0] : vector<16x32xf32> to vector<32xf32>
    %176 = vector.shape_cast %175 : vector<32xf32> to vector<1x32xf32>
    %cst_69 = arith.constant 1.600000e+01 : f32
    %177 = vector.broadcast %cst_69 : f32 to vector<1x32xf32>
    %178 = arith.divf %176, %177 : vector<1x32xf32>
    %c0_70 = arith.constant 0 : index
    %c0_71 = arith.constant 0 : index
    %c0_72 = arith.constant 0 : index
    %179 = vector.load %arg18[%c0_70, %c0_71, %c0_72] : memref<1x1x32xf32, #tpu.memory_space<vmem>>, vector<1x1x32xf32>
    %180 = vector.shape_cast %179 : vector<1x1x32xf32> to vector<1x32xf32>
    %181 = vector.shape_cast %178 : vector<1x32xf32> to vector<1x1x32xf32>
    tpu.vector_store %arg18[%c0_70, %c0_71, %c0_72], %181 {strides = array<i32>} : memref<1x1x32xf32, #tpu.memory_space<vmem>>, vector<1x1x32xf32>,
    return
  }
  func.func @transform_0(%arg0: i32) -> (i32, i32, i32) {
    %c0_i32 = arith.constant 0 : i32
    %c0_i32_0 = arith.constant 0 : i32
    %c0_i32_1 = arith.constant 0 : i32
    return %arg0, %c0_i32, %c0_i32_0 : i32, i32, i32
  }
  func.func @transform_1(%arg0: i32) -> (i32, i32) {
    %c0_i32 = arith.constant 0 : i32
    %c0_i32_0 = arith.constant 0 : i32
    %c0_i32_1 = arith.constant 0 : i32
    return %c0_i32, %c0_i32_0 : i32, i32
  }
  func.func @transform_2(%arg0: i32) -> (i32, i32) {
    %c0_i32 = arith.constant 0 : i32
    %c0_i32_0 = arith.constant 0 : i32
    %c0_i32_1 = arith.constant 0 : i32
    return %c0_i32, %c0_i32_0 : i32, i32
  }
  func.func @transform_3(%arg0: i32) -> (i32, i32) {
    %c0_i32 = arith.constant 0 : i32
    %c0_i32_0 = arith.constant 0 : i32
    %c0_i32_1 = arith.constant 0 : i32
    return %c0_i32, %c0_i32_0 : i32, i32
  }
  func.func @transform_4(%arg0: i32) -> (i32, i32) {
    %c0_i32 = arith.constant 0 : i32
    %c0_i32_0 = arith.constant 0 : i32
    %c0_i32_1 = arith.constant 0 : i32
    return %c0_i32, %c0_i32_0 : i32, i32
  }
  func.func @transform_5(%arg0: i32) -> (i32, i32) {
    %c0_i32 = arith.constant 0 : i32
    %c0_i32_0 = arith.constant 0 : i32
    %c0_i32_1 = arith.constant 0 : i32
    return %c0_i32, %c0_i32_0 : i32, i32
  }
  func.func @transform_6(%arg0: i32) -> (i32, i32) {
    %c0_i32 = arith.constant 0 : i32
    %c0_i32_0 = arith.constant 0 : i32
    %c0_i32_1 = arith.constant 0 : i32
    return %c0_i32, %c0_i32_0 : i32, i32
  }
  func.func @transform_7(%arg0: i32) -> (i32, i32) {
    %c0_i32 = arith.constant 0 : i32
    %c0_i32_0 = arith.constant 0 : i32
    %c0_i32_1 = arith.constant 0 : i32
    return %c0_i32, %c0_i32_0 : i32, i32
  }
  func.func @transform_8(%arg0: i32) -> (i32, i32) {
    %c0_i32 = arith.constant 0 : i32
    %c0_i32_0 = arith.constant 0 : i32
    %c0_i32_1 = arith.constant 0 : i32
    return %c0_i32, %c0_i32_0 : i32, i32
  }
  func.func @transform_9(%arg0: i32) -> (i32, i32) {
    %c0_i32 = arith.constant 0 : i32
    %c0_i32_0 = arith.constant 0 : i32
    %c0_i32_1 = arith.constant 0 : i32
    return %c0_i32, %c0_i32_0 : i32, i32
  }
  func.func @transform_10(%arg0: i32) -> (i32, i32) {
    %c0_i32 = arith.constant 0 : i32
    %c0_i32_0 = arith.constant 0 : i32
    %c0_i32_1 = arith.constant 0 : i32
    return %c0_i32, %c0_i32_0 : i32, i32
  }
  func.func @transform_11(%arg0: i32) -> (i32, i32) {
    %c0_i32 = arith.constant 0 : i32
    %c0_i32_0 = arith.constant 0 : i32
    %c0_i32_1 = arith.constant 0 : i32
    return %c0_i32, %c0_i32_0 : i32, i32
  }
  func.func @transform_12(%arg0: i32) -> (i32, i32) {
    %c0_i32 = arith.constant 0 : i32
    %c0_i32_0 = arith.constant 0 : i32
    %c0_i32_1 = arith.constant 0 : i32
    return %c0_i32, %c0_i32_0 : i32, i32
  }
  func.func @transform_13(%arg0: i32) -> (i32, i32) {
    %c0_i32 = arith.constant 0 : i32
    %c0_i32_0 = arith.constant 0 : i32
    %c0_i32_1 = arith.constant 0 : i32
    return %c0_i32, %c0_i32_0 : i32, i32
  }
  func.func @transform_14(%arg0: i32) -> (i32, i32) {
    %c0_i32 = arith.constant 0 : i32
    %c0_i32_0 = arith.constant 0 : i32
    %c0_i32_1 = arith.constant 0 : i32
    return %c0_i32, %c0_i32_0 : i32, i32
  }
  func.func @transform_15(%arg0: i32) -> (i32, i32) {
    %c0_i32 = arith.constant 0 : i32
    %c0_i32_0 = arith.constant 0 : i32
    %c0_i32_1 = arith.constant 0 : i32
    return %c0_i32, %c0_i32_0 : i32, i32
  }
  func.func @transform_16(%arg0: i32) -> (i32, i32) {
    %c0_i32 = arith.constant 0 : i32
    %c0_i32_0 = arith.constant 0 : i32
    %c0_i32_1 = arith.constant 0 : i32
    return %c0_i32, %c0_i32_0 : i32, i32
  }
  func.func @transform_17(%arg0: i32) -> (i32, i32, i32) {
    %c0_i32 = arith.constant 0 : i32
    %c0_i32_0 = arith.constant 0 : i32
    %c0_i32_1 = arith.constant 0 : i32
    return %arg0, %c0_i32, %c0_i32_0 : i32, i32, i32
  }
}

</mosaic_0001>

<llo_original>
// kernel: mast_forward.1
$region0: #{mast_forward.1}
  #allocation0 [shape = 'u32[]', space=smem, size = 0x4, offset = 0x4, fixed_abs, tag = 'smem constant byte address 0x4 - core index']
  #allocation1 [shape = 'u32[144,128]{1,0:T(1,128)}', space=vmem, size = 0x12000, scoped, tag = 'internal scratch']
  #allocation2 [shape = 'f32[16,64]{1,0:T(8,128)}', space=vmem, size = 0x2000, scoped, tag = 'scratch operand']
  %s0 = inlined_call_operand.vmem [shape: bf16[2,16,16], index: 0, kind: input, shape index: {}]
  %s1 = inlined_call_operand.vmem [shape: bf16[16,32], index: 1, kind: input, shape index: {}]
  %s2 = inlined_call_operand.vmem [shape: f32[1,32], index: 2, kind: input, shape index: {}]
  %s3 = inlined_call_operand.vmem [shape: f32[1,32], index: 3, kind: input, shape index: {}]
  %s4 = inlined_call_operand.vmem [shape: f32[1,32], index: 4, kind: input, shape index: {}]
  %s5 = inlined_call_operand.vmem [shape: bf16[32,96], index: 5, kind: input, shape index: {}]
  %s6 = inlined_call_operand.vmem [shape: f32[1,96], index: 6, kind: input, shape index: {}]
  %s7 = inlined_call_operand.vmem [shape: bf16[32,32], index: 7, kind: input, shape index: {}]
  %s8 = inlined_call_operand.vmem [shape: f32[1,32], index: 8, kind: input, shape index: {}]
  %s9 = inlined_call_operand.vmem [shape: f32[1,32], index: 9, kind: input, shape index: {}]
  %s10 = inlined_call_operand.vmem [shape: f32[1,32], index: 10, kind: input, shape index: {}]
  %s11 = inlined_call_operand.vmem [shape: bf16[32,128], index: 11, kind: input, shape index: {}]
  %s12 = inlined_call_operand.vmem [shape: f32[1,128], index: 12, kind: input, shape index: {}]
  %s13 = inlined_call_operand.vmem [shape: bf16[128,32], index: 13, kind: input, shape index: {}]
  %s14 = inlined_call_operand.vmem [shape: f32[1,32], index: 14, kind: input, shape index: {}]
  %s15 = inlined_call_operand.vmem [shape: f32[1,32], index: 15, kind: input, shape index: {}]
  %s16 = inlined_call_operand.vmem [shape: f32[1,32], index: 16, kind: input, shape index: {}]
  %s17 = inlined_call_operand.hbm [shape: f32[2,1,32], index: 17, kind: output, shape index: {}]
  %s18 = sld [smem:[#allocation0]]
  $region101: #{mast_forward.1} parent=0
    _
  %s20 = ssub.s32 1, %s18
  %s21 = scalar_select 0, %s20, %s18
  $region1: #{mast_forward.1} parent=0
    #allocation3 [shape = 'u8[1024]{0}', space=vmem, size = 0x400, scoped, tag = 'output window, operand 0']
    #allocation4 [shape = 's32[2]{0}', space=sflag, size = 0x8, scoped, tag = 'scoped memory for mast_forward.1']
    %22 = vsyncpa [#allocation4], 0
    %s23 = scalar_lea.sflag [#allocation4], 1
    %24 = vsyncpa %s23, 0
    loop: start=0, step=1, limit=4
    $region2: #{mast_forward.1} parent=1 // loop_pre_header
      _
    $region3: #{mast_forward.1} parent=1 // loop_header
      %s26 = sphi 0, %s30
      %p27 = scmp.ge.s32.totalorder %s26, 4
      %s36 = sphi 0, %s38
      %s39 = sphi 0, %s36
      %s40 = sphi 0, %s39
      %s56 = sphi 0, %s40
      %s60 = sphi 0, %s60
      %s62 = sphi 0, %s60
      %s63 = sphi 0, %s62
      %s77 = sphi 0, %s63
      %s81 = sphi 0, %s81
      %s83 = sphi 0, %s81
      %s84 = sphi 0, %s83
      %s98 = sphi 0, %s84
      %s102 = sphi 0, %s102
      %s104 = sphi 0, %s102
      %s105 = sphi 0, %s104
      %s119 = sphi 0, %s105
      %s123 = sphi 0, %s123
      %s125 = sphi 0, %s123
      %s126 = sphi 0, %s125
      %s140 = sphi 0, %s126
      %s144 = sphi 0, %s144
      %s146 = sphi 0, %s144
      %s147 = sphi 0, %s146
      %s161 = sphi 0, %s147
      %s165 = sphi 0, %s165
      %s167 = sphi 0, %s165
      %s168 = sphi 0, %s167
      %s182 = sphi 0, %s168
      %s186 = sphi 0, %s186
      %s188 = sphi 0, %s186
      %s189 = sphi 0, %s188
      %s203 = sphi 0, %s189
      %s207 = sphi 0, %s207
      %s209 = sphi 0, %s207
      %s210 = sphi 0, %s209
      %s224 = sphi 0, %s210
      %s228 = sphi 0, %s228
      %s230 = sphi 0, %s228
      %s231 = sphi 0, %s230
      %s245 = sphi 0, %s231
      %s249 = sphi 0, %s249
      %s251 = sphi 0, %s249
      %s252 = sphi 0, %s251
      %s266 = sphi 0, %s252
      %s270 = sphi 0, %s270
      %s272 = sphi 0, %s270
      %s273 = sphi 0, %s272
      %s287 = sphi 0, %s273
      %s291 = sphi 0, %s291
      %s293 = sphi 0, %s291
      %s294 = sphi 0, %s293
      %s308 = sphi 0, %s294
      %s312 = sphi 0, %s312
      %s314 = sphi 0, %s312
      %s315 = sphi 0, %s314
      %s329 = sphi 0, %s315
      %s333 = sphi 0, %s333
      %s335 = sphi 0, %s333
      %s336 = sphi 0, %s335
      %s350 = sphi 0, %s336
      %s354 = sphi 0, %s354
      %s356 = sphi 0, %s354
      %s357 = sphi 0, %s356
      %s371 = sphi 0, %s357
      %s375 = sphi 0, %s375
      %s377 = sphi 0, %s375
      %s378 = sphi 0, %s377
      %s392 = sphi 0, %s378
      %s398 = sphi 0, %s400
      %s401 = sphi 0, %s398
      %s402 = sphi 0, %s401
      %s418 = sphi 0, %s402
    $region4: #{mast_forward.1} parent=1 // loop_header_branch
      %29 = sbr.rel (%p27) target = $region8
    $region5: #{mast_forward.1} parent=1 // loop_body
      %s31 = ssub.s32 %s26, 1
      %s32 = ssub.s32 %s26, 2
      %s33 = sadd.s32 %s26, 1
      %s34 = ssub.s32 %s26, %s33
      %p35 = scmp.eq.s32.totalorder %s34, 0
      %s37 = sadd.s32 %s36, 1
      %s38 = scalar_select %p35, %s36, %s37
      %p41 = pneg %p35
      %p42 = scmp.eq.s32.totalorder %s26, 1
      %p43 = por %p41, %p42
      %p44 = scmp.ne.s32.totalorder %s36, %s39
      %p45 = scmp.eq.s32.totalorder %s26, 0
      %p46 = por %p44, %p45
      %p47 = scmp.ne.s32.totalorder %s36, %s39
      %p48 = scmp.eq.s32.totalorder %s31, 1
      %p49 = por %p47, %p48
      %p50 = scmp.ne.s32.totalorder %s39, %s40
      %p51 = scmp.eq.s32.totalorder %s31, 0
      %p52 = por %p50, %p51
      %p53 = scmp.ne.s32.totalorder %s39, %s40
      %p54 = scmp.eq.s32.totalorder %s32, 1
      %p55 = por %p53, %p54
      %p57 = scmp.ne.s32.totalorder %s40, %s56
      %p58 = scmp.eq.s32.totalorder %s32, 0
      %p59 = por %p57, %p58
      %s61 = sadd.s32 %s60, 1
      %p64 = scmp.eq.s32.totalorder %s26, 1
      %p65 = scmp.ne.s32.totalorder %s60, %s62
      %p66 = scmp.eq.s32.totalorder %s26, 0
      %p67 = por %p65, %p66
      %p68 = scmp.ne.s32.totalorder %s60, %s62
      %p69 = scmp.eq.s32.totalorder %s31, 1
      %p70 = por %p68, %p69
      %p71 = scmp.ne.s32.totalorder %s62, %s63
      %p72 = scmp.eq.s32.totalorder %s31, 0
      %p73 = por %p71, %p72
      %p74 = scmp.ne.s32.totalorder %s62, %s63
      %p75 = scmp.eq.s32.totalorder %s32, 1
      %p76 = por %p74, %p75
      %p78 = scmp.ne.s32.totalorder %s63, %s77
      %p79 = scmp.eq.s32.totalorder %s32, 0
      %p80 = por %p78, %p79
      %s82 = sadd.s32 %s81, 1
      %p85 = scmp.eq.s32.totalorder %s26, 1
      %p86 = scmp.ne.s32.totalorder %s81, %s83
      %p87 = scmp.eq.s32.totalorder %s26, 0
      %p88 = por %p86, %p87
      %p89 = scmp.ne.s32.totalorder %s81, %s83
      %p90 = scmp.eq.s32.totalorder %s31, 1
      %p91 = por %p89, %p90
      %p92 = scmp.ne.s32.totalorder %s83, %s84
      %p93 = scmp.eq.s32.totalorder %s31, 0
      %p94 = por %p92, %p93
      %p95 = scmp.ne.s32.totalorder %s83, %s84
      %p96 = scmp.eq.s32.totalorder %s32, 1
      %p97 = por %p95, %p96
      %p99 = scmp.ne.s32.totalorder %s84, %s98
      %p100 = scmp.eq.s32.totalorder %s32, 0
      %p101 = por %p99, %p100
      %s103 = sadd.s32 %s102, 1
      %p106 = scmp.eq.s32.totalorder %s26, 1
      %p107 = scmp.ne.s32.totalorder %s102, %s104
      %p108 = scmp.eq.s32.totalorder %s26, 0
      %p109 = por %p107, %p108
      %p110 = scmp.ne.s32.totalorder %s102, %s104
      %p111 = scmp.eq.s32.totalorder %s31, 1
      %p112 = por %p110, %p111
      %p113 = scmp.ne.s32.totalorder %s104, %s105
      %p114 = scmp.eq.s32.totalorder %s31, 0
      %p115 = por %p113, %p114
      %p116 = scmp.ne.s32.totalorder %s104, %s105
      %p117 = scmp.eq.s32.totalorder %s32, 1
      %p118 = por %p116, %p117
      %p120 = scmp.ne.s32.totalorder %s105, %s119
      %p121 = scmp.eq.s32.totalorder %s32, 0
      %p122 = por %p120, %p121
      %s124 = sadd.s32 %s123, 1
      %p127 = scmp.eq.s32.totalorder %s26, 1
      %p128 = scmp.ne.s32.totalorder %s123, %s125
      %p129 = scmp.eq.s32.totalorder %s26, 0
      %p130 = por %p128, %p129
      %p131 = scmp.ne.s32.totalorder %s123, %s125
      %p132 = scmp.eq.s32.totalorder %s31, 1
      %p133 = por %p131, %p132
      %p134 = scmp.ne.s32.totalorder %s125, %s126
      %p135 = scmp.eq.s32.totalorder %s31, 0
      %p136 = por %p134, %p135
      %p137 = scmp.ne.s32.totalorder %s125, %s126
      %p138 = scmp.eq.s32.totalorder %s32, 1
      %p139 = por %p137, %p138
      %p141 = scmp.ne.s32.totalorder %s126, %s140
      %p142 = scmp.eq.s32.totalorder %s32, 0
      %p143 = por %p141, %p142
      %s145 = sadd.s32 %s144, 1
      %p148 = scmp.eq.s32.totalorder %s26, 1
      %p149 = scmp.ne.s32.totalorder %s144, %s146
      %p150 = scmp.eq.s32.totalorder %s26, 0
      %p151 = por %p149, %p150
      %p152 = scmp.ne.s32.totalorder %s144, %s146
      %p153 = scmp.eq.s32.totalorder %s31, 1
      %p154 = por %p152, %p153
      %p155 = scmp.ne.s32.totalorder %s146, %s147
      %p156 = scmp.eq.s32.totalorder %s31, 0
      %p157 = por %p155, %p156
      %p158 = scmp.ne.s32.totalorder %s146, %s147
      %p159 = scmp.eq.s32.totalorder %s32, 1
      %p160 = por %p158, %p159
      %p162 = scmp.ne.s32.totalorder %s147, %s161
      %p163 = scmp.eq.s32.totalorder %s32, 0
      %p164 = por %p162, %p163
      %s166 = sadd.s32 %s165, 1
      %p169 = scmp.eq.s32.totalorder %s26, 1
      %p170 = scmp.ne.s32.totalorder %s165, %s167
      %p171 = scmp.eq.s32.totalorder %s26, 0
      %p172 = por %p170, %p171
      %p173 = scmp.ne.s32.totalorder %s165, %s167
      %p174 = scmp.eq.s32.totalorder %s31, 1
      %p175 = por %p173, %p174
      %p176 = scmp.ne.s32.totalorder %s167, %s168
      %p177 = scmp.eq.s32.totalorder %s31, 0
      %p178 = por %p176, %p177
      %p179 = scmp.ne.s32.totalorder %s167, %s168
      %p180 = scmp.eq.s32.totalorder %s32, 1
      %p181 = por %p179, %p180
      %p183 = scmp.ne.s32.totalorder %s168, %s182
      %p184 = scmp.eq.s32.totalorder %s32, 0
      %p185 = por %p183, %p184
      %s187 = sadd.s32 %s186, 1
      %p190 = scmp.eq.s32.totalorder %s26, 1
      %p191 = scmp.ne.s32.totalorder %s186, %s188
      %p192 = scmp.eq.s32.totalorder %s26, 0
      %p193 = por %p191, %p192
      %p194 = scmp.ne.s32.totalorder %s186, %s188
      %p195 = scmp.eq.s32.totalorder %s31, 1
      %p196 = por %p194, %p195
      %p197 = scmp.ne.s32.totalorder %s188, %s189
      %p198 = scmp.eq.s32.totalorder %s31, 0
      %p199 = por %p197, %p198
      %p200 = scmp.ne.s32.totalorder %s188, %s189
      %p201 = scmp.eq.s32.totalorder %s32, 1
      %p202 = por %p200, %p201
      %p204 = scmp.ne.s32.totalorder %s189, %s203
      %p205 = scmp.eq.s32.totalorder %s32, 0
      %p206 = por %p204, %p205
      %s208 = sadd.s32 %s207, 1
      %p211 = scmp.eq.s32.totalorder %s26, 1
      %p212 = scmp.ne.s32.totalorder %s207, %s209
      %p213 = scmp.eq.s32.totalorder %s26, 0
      %p214 = por %p212, %p213
      %p215 = scmp.ne.s32.totalorder %s207, %s209
      %p216 = scmp.eq.s32.totalorder %s31, 1
      %p217 = por %p215, %p216
      %p218 = scmp.ne.s32.totalorder %s209, %s210
      %p219 = scmp.eq.s32.totalorder %s31, 0
      %p220 = por %p218, %p219
      %p221 = scmp.ne.s32.totalorder %s209, %s210
      %p222 = scmp.eq.s32.totalorder %s32, 1
      %p223 = por %p221, %p222
      %p225 = scmp.ne.s32.totalorder %s210, %s224
      %p226 = scmp.eq.s32.totalorder %s32, 0
      %p227 = por %p225, %p226
      %s229 = sadd.s32 %s228, 1
      %p232 = scmp.eq.s32.totalorder %s26, 1
      %p233 = scmp.ne.s32.totalorder %s228, %s230
      %p234 = scmp.eq.s32.totalorder %s26, 0
      %p235 = por %p233, %p234
      %p236 = scmp.ne.s32.totalorder %s228, %s230
      %p237 = scmp.eq.s32.totalorder %s31, 1
      %p238 = por %p236, %p237
      %p239 = scmp.ne.s32.totalorder %s230, %s231
      %p240 = scmp.eq.s32.totalorder %s31, 0
      %p241 = por %p239, %p240
      %p242 = scmp.ne.s32.totalorder %s230, %s231
      %p243 = scmp.eq.s32.totalorder %s32, 1
      %p244 = por %p242, %p243
      %p246 = scmp.ne.s32.totalorder %s231, %s245
      %p247 = scmp.eq.s32.totalorder %s32, 0
      %p248 = por %p246, %p247
      %s250 = sadd.s32 %s249, 1
      %p253 = scmp.eq.s32.totalorder %s26, 1
      %p254 = scmp.ne.s32.totalorder %s249, %s251
      %p255 = scmp.eq.s32.totalorder %s26, 0
      %p256 = por %p254, %p255
      %p257 = scmp.ne.s32.totalorder %s249, %s251
      %p258 = scmp.eq.s32.totalorder %s31, 1
      %p259 = por %p257, %p258
      %p260 = scmp.ne.s32.totalorder %s251, %s252
      %p261 = scmp.eq.s32.totalorder %s31, 0
      %p262 = por %p260, %p261
      %p263 = scmp.ne.s32.totalorder %s251, %s252
      %p264 = scmp.eq.s32.totalorder %s32, 1
      %p265 = por %p263, %p264
      %p267 = scmp.ne.s32.totalorder %s252, %s266
      %p268 = scmp.eq.s32.totalorder %s32, 0
      %p269 = por %p267, %p268
      %s271 = sadd.s32 %s270, 1
      %p274 = scmp.eq.s32.totalorder %s26, 1
      %p275 = scmp.ne.s32.totalorder %s270, %s272
      %p276 = scmp.eq.s32.totalorder %s26, 0
      %p277 = por %p275, %p276
      %p278 = scmp.ne.s32.totalorder %s270, %s272
      %p279 = scmp.eq.s32.totalorder %s31, 1
      %p280 = por %p278, %p279
      %p281 = scmp.ne.s32.totalorder %s272, %s273
      %p282 = scmp.eq.s32.totalorder %s31, 0
      %p283 = por %p281, %p282
      %p284 = scmp.ne.s32.totalorder %s272, %s273
      %p285 = scmp.eq.s32.totalorder %s32, 1
      %p286 = por %p284, %p285
      %p288 = scmp.ne.s32.totalorder %s273, %s287
      %p289 = scmp.eq.s32.totalorder %s32, 0
      %p290 = por %p288, %p289
      %s292 = sadd.s32 %s291, 1
      %p295 = scmp.eq.s32.totalorder %s26, 1
      %p296 = scmp.ne.s32.totalorder %s291, %s293
      %p297 = scmp.eq.s32.totalorder %s26, 0
      %p298 = por %p296, %p297
      %p299 = scmp.ne.s32.totalorder %s291, %s293
      %p300 = scmp.eq.s32.totalorder %s31, 1
      %p301 = por %p299, %p300
      %p302 = scmp.ne.s32.totalorder %s293, %s294
      %p303 = scmp.eq.s32.totalorder %s31, 0
      %p304 = por %p302, %p303
      %p305 = scmp.ne.s32.totalorder %s293, %s294
      %p306 = scmp.eq.s32.totalorder %s32, 1
      %p307 = por %p305, %p306
      %p309 = scmp.ne.s32.totalorder %s294, %s308
      %p310 = scmp.eq.s32.totalorder %s32, 0
      %p311 = por %p309, %p310
      %s313 = sadd.s32 %s312, 1
      %p316 = scmp.eq.s32.totalorder %s26, 1
      %p317 = scmp.ne.s32.totalorder %s312, %s314
      %p318 = scmp.eq.s32.totalorder %s26, 0
      %p319 = por %p317, %p318
      %p320 = scmp.ne.s32.totalorder %s312, %s314
      %p321 = scmp.eq.s32.totalorder %s31, 1
      %p322 = por %p320, %p321
      %p323 = scmp.ne.s32.totalorder %s314, %s315
      %p324 = scmp.eq.s32.totalorder %s31, 0
      %p325 = por %p323, %p324
      %p326 = scmp.ne.s32.totalorder %s314, %s315
      %p327 = scmp.eq.s32.totalorder %s32, 1
      %p328 = por %p326, %p327
      %p330 = scmp.ne.s32.totalorder %s315, %s329
      %p331 = scmp.eq.s32.totalorder %s32, 0
      %p332 = por %p330, %p331
      %s334 = sadd.s32 %s333, 1
      %p337 = scmp.eq.s32.totalorder %s26, 1
      %p338 = scmp.ne.s32.totalorder %s333, %s335
      %p339 = scmp.eq.s32.totalorder %s26, 0
      %p340 = por %p338, %p339
      %p341 = scmp.ne.s32.totalorder %s333, %s335
      %p342 = scmp.eq.s32.totalorder %s31, 1
      %p343 = por %p341, %p342
      %p344 = scmp.ne.s32.totalorder %s335, %s336
      %p345 = scmp.eq.s32.totalorder %s31, 0
      %p346 = por %p344, %p345
      %p347 = scmp.ne.s32.totalorder %s335, %s336
      %p348 = scmp.eq.s32.totalorder %s32, 1
      %p349 = por %p347, %p348
      %p351 = scmp.ne.s32.totalorder %s336, %s350
      %p352 = scmp.eq.s32.totalorder %s32, 0
      %p353 = por %p351, %p352
      %s355 = sadd.s32 %s354, 1
      %p358 = scmp.eq.s32.totalorder %s26, 1
      %p359 = scmp.ne.s32.totalorder %s354, %s356
      %p360 = scmp.eq.s32.totalorder %s26, 0
      %p361 = por %p359, %p360
      %p362 = scmp.ne.s32.totalorder %s354, %s356
      %p363 = scmp.eq.s32.totalorder %s31, 1
      %p364 = por %p362, %p363
      %p365 = scmp.ne.s32.totalorder %s356, %s357
      %p366 = scmp.eq.s32.totalorder %s31, 0
      %p367 = por %p365, %p366
      %p368 = scmp.ne.s32.totalorder %s356, %s357
      %p369 = scmp.eq.s32.totalorder %s32, 1
      %p370 = por %p368, %p369
      %p372 = scmp.ne.s32.totalorder %s357, %s371
      %p373 = scmp.eq.s32.totalorder %s32, 0
      %p374 = por %p372, %p373
      %s376 = sadd.s32 %s375, 1
      %p379 = scmp.eq.s32.totalorder %s26, 1
      %p380 = scmp.ne.s32.totalorder %s375, %s377
      %p381 = scmp.eq.s32.totalorder %s26, 0
      %p382 = por %p380, %p381
      %p383 = scmp.ne.s32.totalorder %s375, %s377
      %p384 = scmp.eq.s32.totalorder %s31, 1
      %p385 = por %p383, %p384
      %p386 = scmp.ne.s32.totalorder %s377, %s378
      %p387 = scmp.eq.s32.totalorder %s31, 0
      %p388 = por %p386, %p387
      %p389 = scmp.ne.s32.totalorder %s377, %s378
      %p390 = scmp.eq.s32.totalorder %s32, 1
      %p391 = por %p389, %p390
      %p393 = scmp.ne.s32.totalorder %s378, %s392
      %p394 = scmp.eq.s32.totalorder %s32, 0
      %p395 = por %p393, %p394
      %s396 = ssub.s32 %s26, %s33
      %p397 = scmp.eq.s32.totalorder %s396, 0
      %s399 = sadd.s32 %s398, 1
      %s400 = scalar_select %p397, %s398, %s399
      %p403 = pneg %p397
      %p404 = scmp.eq.s32.totalorder %s26, 1
      %p405 = por %p403, %p404
      %p406 = scmp.ne.s32.totalorder %s398, %s401
      %p407 = scmp.eq.s32.totalorder %s26, 0
      %p408 = por %p406, %p407
      %p409 = scmp.ne.s32.totalorder %s398, %s401
      %p410 = scmp.eq.s32.totalorder %s31, 1
      %p411 = por %p409, %p410
      %p412 = scmp.ne.s32.totalorder %s401, %s402
      %p413 = scmp.eq.s32.totalorder %s31, 0
      %p414 = por %p412, %p413
      %p415 = scmp.ne.s32.totalorder %s401, %s402
      %p416 = scmp.eq.s32.totalorder %s32, 1
      %p417 = por %p415, %p416
      %p419 = scmp.ne.s32.totalorder %s402, %s418
      %p420 = scmp.eq.s32.totalorder %s32, 0
      %p421 = por %p419, %p420
      %p422 = scmp.le.s32.totalorder 1, %s26
      %p423 = scmp.lt.s32.totalorder %s26, 3
      %p424 = pnand %p422, %p423
      %p425 = pneg %p424
      // Predicated region
      $region9: #{mast_forward.1} parent=5 // pred_check
        _
      $region10: #{mast_forward.1} parent=5 // pred_check_branch
        %427 = sbr.rel (%p424) target = $region12
      $region11: #{mast_forward.1} parent=5 // pred_region
        %s428 = ssub.s32 %s26, 1
        // Predicated region
        $region13: #{mast_forward.1} parent=11 // pred_check
          %p429 = pneg %p73
        $region14: #{mast_forward.1} parent=11 // pred_check_branch
          %431 = sbr.rel (%p429) target = $region16
        $region15: #{mast_forward.1} parent=11 // pred_region
          _
        $region16: #{mast_forward.1} parent=11 // pred_fallthru
          _
        // Predicated region
        $region17: #{mast_forward.1} parent=11 // pred_check
          %p432 = pneg %p94
        $region18: #{mast_forward.1} parent=11 // pred_check_branch
          %434 = sbr.rel (%p432) target = $region20
        $region19: #{mast_forward.1} parent=11 // pred_region
          _
        $region20: #{mast_forward.1} parent=11 // pred_fallthru
          _
        // Predicated region
        $region21: #{mast_forward.1} parent=11 // pred_check
          %p435 = pneg %p115
        $region22: #{mast_forward.1} parent=11 // pred_check_branch
          %437 = sbr.rel (%p435) target = $region24
        $region23: #{mast_forward.1} parent=11 // pred_region
          _
        $region24: #{mast_forward.1} parent=11 // pred_fallthru
          _
        // Predicated region
        $region25: #{mast_forward.1} parent=11 // pred_check
          %p438 = pneg %p136
        $region26: #{mast_forward.1} parent=11 // pred_check_branch
          %440 = sbr.rel (%p438) target = $region28
        $region27: #{mast_forward.1} parent=11 // pred_region
          _
        $region28: #{mast_forward.1} parent=11 // pred_fallthru
          _
        // Predicated region
        $region29: #{mast_forward.1} parent=11 // pred_check
          %p441 = pneg %p157
        $region30: #{mast_forward.1} parent=11 // pred_check_branch
          %443 = sbr.rel (%p441) target = $region32
        $region31: #{mast_forward.1} parent=11 // pred_region
          _
        $region32: #{mast_forward.1} parent=11 // pred_fallthru
          _
        // Predicated region
        $region33: #{mast_forward.1} parent=11 // pred_check
          %p444 = pneg %p178
        $region34: #{mast_forward.1} parent=11 // pred_check_branch
          %446 = sbr.rel (%p444) target = $region36
        $region35: #{mast_forward.1} parent=11 // pred_region
          _
        $region36: #{mast_forward.1} parent=11 // pred_fallthru
          _
        // Predicated region
        $region37: #{mast_forward.1} parent=11 // pred_check
          %p447 = pneg %p199
        $region38: #{mast_forward.1} parent=11 // pred_check_branch
          %449 = sbr.rel (%p447) target = $region40
        $region39: #{mast_forward.1} parent=11 // pred_region
          _
        $region40: #{mast_forward.1} parent=11 // pred_fallthru
          _
        // Predicated region
        $region41: #{mast_forward.1} parent=11 // pred_check
          %p450 = pneg %p220
        $region42: #{mast_forward.1} parent=11 // pred_check_branch
          %452 = sbr.rel (%p450) target = $region44
        $region43: #{mast_forward.1} parent=11 // pred_region
          _
        $region44: #{mast_forward.1} parent=11 // pred_fallthru
          _
        // Predicated region
        $region45: #{mast_forward.1} parent=11 // pred_check
          %p453 = pneg %p241
        $region46: #{mast_forward.1} parent=11 // pred_check_branch
          %455 = sbr.rel (%p453) target = $region48
        $region47: #{mast_forward.1} parent=11 // pred_region
          _
        $region48: #{mast_forward.1} parent=11 // pred_fallthru
          _
        // Predicated region
        $region49: #{mast_forward.1} parent=11 // pred_check
          %p456 = pneg %p262
        $region50: #{mast_forward.1} parent=11 // pred_check_branch
          %458 = sbr.rel (%p456) target = $region52
        $region51: #{mast_forward.1} parent=11 // pred_region
          _
        $region52: #{mast_forward.1} parent=11 // pred_fallthru
          _
        // Predicated region
        $region53: #{mast_forward.1} parent=11 // pred_check
          %p459 = pneg %p283
        $region54: #{mast_forward.1} parent=11 // pred_check_branch
          %461 = sbr.rel (%p459) target = $region56
        $region55: #{mast_forward.1} parent=11 // pred_region
          _
        $region56: #{mast_forward.1} parent=11 // pred_fallthru
          _
        // Predicated region
        $region57: #{mast_forward.1} parent=11 // pred_check
          %p462 = pneg %p304
        $region58: #{mast_forward.1} parent=11 // pred_check_branch
          %464 = sbr.rel (%p462) target = $region60
        $region59: #{mast_forward.1} parent=11 // pred_region
          _
        $region60: #{mast_forward.1} parent=11 // pred_fallthru
          _
        // Predicated region
        $region61: #{mast_forward.1} parent=11 // pred_check
          %p465 = pneg %p325
        $region62: #{mast_forward.1} parent=11 // pred_check_branch
          %467 = sbr.rel (%p465) target = $region64
        $region63: #{mast_forward.1} parent=11 // pred_region
          _
        $region64: #{mast_forward.1} parent=11 // pred_fallthru
          _
        // Predicated region
        $region65: #{mast_forward.1} parent=11 // pred_check
          %p468 = pneg %p346
        $region66: #{mast_forward.1} parent=11 // pred_check_branch
          %470 = sbr.rel (%p468) target = $region68
        $region67: #{mast_forward.1} parent=11 // pred_region
          _
        $region68: #{mast_forward.1} parent=11 // pred_fallthru
          _
        // Predicated region
        $region69: #{mast_forward.1} parent=11 // pred_check
          %p471 = pneg %p367
        $region70: #{mast_forward.1} parent=11 // pred_check_branch
          %473 = sbr.rel (%p471) target = $region72
        $region71: #{mast_forward.1} parent=11 // pred_region
          _
        $region72: #{mast_forward.1} parent=11 // pred_fallthru
          _
        // Predicated region
        $region73: #{mast_forward.1} parent=11 // pred_check
          %p474 = pneg %p388
        $region74: #{mast_forward.1} parent=11 // pred_check_branch
          %476 = sbr.rel (%p474) target = $region76
        $region75: #{mast_forward.1} parent=11 // pred_region
          _
        $region76: #{mast_forward.1} parent=11 // pred_fallthru
          _
      $region12: #{mast_forward.1} parent=5 // pred_fallthru
        _
      %p477 = scmp.lt.s32.totalorder %s26, 2
      // Predicated region
      $region77: #{mast_forward.1} parent=5 // pred_check
        %p478 = pneg %p477
      $region78: #{mast_forward.1} parent=5 // pred_check_branch
        %480 = sbr.rel (%p478) target = $region80
      $region79: #{mast_forward.1} parent=5 // pred_region
        // Predicated region
        $region81: #{mast_forward.1} parent=79 // pred_check
          %p481 = pneg %p46
        $region82: #{mast_forward.1} parent=79 // pred_check_branch
          %483 = sbr.rel (%p481) target = $region84
        $region83: #{mast_forward.1} parent=79 // pred_region
          %p484 = scmp.lt.s32.totalorder %s26, 1
          %s485 = scalar_select %p484, %s26, 1
          %s486 = smul.addr %s485, 2
          %s487 = smul.addr %s486, 4
          %s488 = scalar_lea.vmem %s0, %s487
        $region84: #{mast_forward.1} parent=79 // pred_fallthru
          _
      $region80: #{mast_forward.1} parent=5 // pred_fallthru
        _
      %p489 = scmp.le.s32.totalorder 1, %s26
      %p490 = scmp.lt.s32.totalorder %s26, 3
      %p491 = pnand %p489, %p490
      %p492 = pneg %p491
      // Predicated region
      $region85: #{mast_forward.1} parent=5 // pred_check
        _
      $region86: #{mast_forward.1} parent=5 // pred_check_branch
        %494 = sbr.rel (%p491) target = $region88
      $region87: #{mast_forward.1} parent=5 // pred_region
        %s495 = ssub.s32 %s26, 1
        %p496 = scmp.lt.s32.totalorder %s31, 1
        %s497 = scalar_select %p496, %s31, 1
        %s498 = smul.addr %s497, 2
        %s499 = smul.addr %s498, 4
        %s500 = scalar_lea.vmem %s0, %s499
        %p501 = pneg %p52
        %p502 = pneg %p49
        %p503 = pneg %p73
        %p504 = pneg %p70
        %p505 = pneg %p94
        %p506 = pneg %p91
        %p507 = pneg %p115
        %p508 = pneg %p112
        %p509 = pneg %p136
        %p510 = pneg %p133
        %p511 = pneg %p157
        %p512 = pneg %p154
        %p513 = pneg %p178
        %p514 = pneg %p175
        %p515 = pneg %p199
        %p516 = pneg %p196
        %p517 = pneg %p220
        %p518 = pneg %p217
        %p519 = pneg %p241
        %p520 = pneg %p238
        %p521 = pneg %p262
        %p522 = pneg %p259
        %p523 = pneg %p283
        %p524 = pneg %p280
        %p525 = pneg %p304
        %p526 = pneg %p301
        %p527 = pneg %p325
        %p528 = pneg %p322
        %p529 = pneg %p346
        %p530 = pneg %p343
        %p531 = pneg %p367
        %p532 = pneg %p364
        %p533 = pneg %p388
        %p534 = pneg %p385
        %p535 = pneg %p414
        %p536 = pneg %p411
        %s537 = sand.u32 %s401, 1
        %s538 = scalar_lea.sflag [#allocation4], %s537
        %s539 = sand.u32 %s401, 1
        %s540 = scalar_lea.vmem [#allocation3], %s539
        %p541 = scmp.lt.s32.totalorder %s31, 1
        %s542 = scalar_select %p541, %s31, 1
        %s543 = smul.addr %s542, 2
        %s544 = smul.addr %s543, 4
        %s545 = scalar_lea.vmem %s0, %s544
        %v547 = vld [vmem:[%s545] sm:$0xf]
        %v548 = vld [vmem:[%s545 + $0x4] sm:$0xf]
        %v549 = vld [vmem:[%s1] sm:$0xf]
        %v550 = vld [vmem:[%s1 + $0x4] sm:$0xf]
        %v551 = vld [vmem:[%s2] sm:$0x1]
        %v553 = vlaneseq
        %v554 = vshrl.u32 %v553, 7
        %v555 = vsub.s32 0, %v554
        %v556 = vrot.slane %v551, %v555
        %v560 = vunpack.c.l.b16 %v547
        %v561 = vunpack.c.l.b16 %v548
        %v562 = vpack.c.b16 %v561, %v560
        %v565 = vunpack.c.l.b16 %v549
        %v566 = vunpack.c.l.b16 %v550
        %v567 = vpack.c.b16 %v566, %v565
        %vm569 = vcmask 130048
        %v571 = vsel %vm569, %v562, 0
        %573 = vmatprep.subr.bf16.mxu0 0
        %574 = vmatpush1.bf16.msra.mxu0 0
        %575 = vmatprep.subr.bf16.mxu0 0
        %576 = vmatpush1.bf16.msra.mxu0 0
        %577 = vmatprep.subr.bf16.mxu0 0
        %578 = vmatpush1.bf16.msra.mxu0 0
        %579 = vmatprep.subr.bf16.mxu0 0
        %580 = vmatpush1.bf16.msra.mxu0 0
        %581 = vmatprep.subr.bf16.mxu0 0
        %582 = vmatpush1.bf16.msra.mxu0 0
        %583 = vmatprep.subr.bf16.mxu0 0
        %584 = vmatpush1.bf16.msra.mxu0 0
        %585 = vmatprep.subr.bf16.mxu0 0
        %586 = vmatpush1.bf16.msra.mxu0 0
        %587 = vmatprep.subr.bf16.mxu0 0
        %588 = vmatpush1.bf16.msra.mxu0 %v567
        %589 = vmatprep.subr.bf16.mxu0 0
        %590 = vmatpush2.bf16.msra.mxu0 0
        %591 = vmatprep.subr.bf16.mxu0 0
        %592 = vmatpush2.bf16.msra.mxu0 0
        %593 = vmatprep.subr.bf16.mxu0 0
        %594 = vmatpush2.bf16.msra.mxu0 0
        %595 = vmatprep.subr.bf16.mxu0 0
        %596 = vmatpush2.bf16.msra.mxu0 0
        %597 = vmatprep.subr.bf16.mxu0 0
        %598 = vmatpush2.bf16.msra.mxu0 0
        %599 = vmatprep.subr.bf16.mxu0 0
        %600 = vmatpush2.bf16.msra.mxu0 0
        %601 = vmatprep.subr.bf16.mxu0 0
        %602 = vmatpush2.bf16.msra.mxu0 0
        %603 = vmatprep.subr.bf16.mxu0 0
        %604 = vmatpush2.bf16.msra.mxu0 0
        %605 = vmatprep.mubr.bf16.mxu0 0
        %606 = vmatmul.mubr.bf16.gmra.mxu0 %v571
        %v607 = vpop.f32.mrf.mxu0
        %v608 = vadd.f32 %v556, %v607
        %v609 = vpop.f32.mrf.mxu0
        %v610 = vpop.f32.mrf.mxu0
        %v611 = vadd.f32 %v556, %v610
        %v612 = vpop.f32.mrf.mxu0
        %613 = vdwg.mxu0
        %v614 = vld [vmem:[%s3] sm:$0x1]
        %v615 = vld [vmem:[%s4] sm:$0x1]
        %vm616 = vcmask 261120
        %v617 = vsel %vm616, %v608, 0.0
        %618 = vadd.xlane.f32.xlu0 %v617
        %v619 = vpop.xlane.xlu0 %618
        %v620 = vsel %vm616, %v611, 0.0
        %621 = vadd.xlane.f32.xlu0 %v620
        %v622 = vpop.xlane.xlu0 %621
        %v623 = vrcp.pop 32.0
        %v624 = vmul.f32 %v619, %v623
        %v625 = vmul.f32 %v622, %v623
        %v626 = vsub.f32 %v608, %v624
        %v627 = vsub.f32 %v611, %v625
        %v628 = vmul.f32 %v626, %v626
        %v629 = vmul.f32 %v627, %v627
        %v630 = vsel %vm616, %v628, 0.0
        %631 = vadd.xlane.f32.xlu0 %v630
        %v632 = vpop.xlane.xlu0 %631
        %v633 = vsel %vm616, %v629, 0.0
        %634 = vadd.xlane.f32.xlu0 %v633
        %v635 = vpop.xlane.xlu0 %634
        %v636 = vmul.f32 %v632, %v623
        %v637 = vmul.f32 %v635, %v623
        %v638 = vadd.f32 %v636, 1e-05
        %v639 = vadd.f32 %v637, 1e-05
        %v640 = vrsqrt.pop %v638
        %v641 = vrsqrt.pop %v639
        %v642 = vmul.f32 %v626, %v640
        %v643 = vmul.f32 %v627, %v641
        %v645 = vlaneseq
        %v646 = vshrl.u32 %v645, 7
        %v647 = vsub.s32 0, %v646
        %v648 = vrot.slane %v614, %v647
        %v650 = vmul.f32 %v642, %v648
        %v651 = vmul.f32 %v643, %v648
        %v653 = vlaneseq
        %v654 = vshrl.u32 %v653, 7
        %v655 = vsub.s32 0, %v654
        %v656 = vrot.slane %v615, %v655
        %v658 = vadd.f32 %v650, %v656
        %v659 = vadd.f32 %v651, %v656
        %v660 = vpack.c.bf16 %v659, %v658
        %v661 = vld [vmem:[%s5] sm:$0xf]
        %v662 = vld [vmem:[%s5 + $0x4] sm:$0xf]
        %v663 = vld [vmem:[%s5 + $0x8] sm:$0xf]
        %v664 = vld [vmem:[%s5 + $0xc] sm:$0xf]
        %v665 = vld [vmem:[%s6] sm:$0x1]
        %v667 = vlaneseq
        %v668 = vshrl.u32 %v667, 7
        %v669 = vsub.s32 0, %v668
        %v670 = vrot.slane %v665, %v669
        %v676 = vunpack.c.l.b16 %v661
        %v677 = vunpack.c.l.b16 %v662
        %v678 = vunpack.c.l.b16 %v663
        %v679 = vunpack.c.l.b16 %v664
        %v680 = vpack.c.b16 %v677, %v676
        %v681 = vpack.c.b16 %v679, %v678
        %v685 = vsel %vm616, %v660, 0
        %687 = vmatprep.subr.bf16.mxu0 0
        %688 = vmatpush1.bf16.msra.mxu0 0
        %689 = vmatprep.subr.bf16.mxu0 0
        %690 = vmatpush1.bf16.msra.mxu0 0
        %691 = vmatprep.subr.bf16.mxu0 0
        %692 = vmatpush1.bf16.msra.mxu0 0
        %693 = vmatprep.subr.bf16.mxu0 0
        %694 = vmatpush1.bf16.msra.mxu0 0
        %695 = vmatprep.subr.bf16.mxu0 0
        %696 = vmatpush1.bf16.msra.mxu0 0
        %697 = vmatprep.subr.bf16.mxu0 0
        %698 = vmatpush1.bf16.msra.mxu0 0
        %699 = vmatprep.subr.bf16.mxu0 0
        %700 = vmatpush1.bf16.msra.mxu0 %v681
        %701 = vmatprep.subr.bf16.mxu0 0
        %702 = vmatpush1.bf16.msra.mxu0 %v680
        %703 = vmatprep.subr.bf16.mxu0 0
        %704 = vmatpush2.bf16.msra.mxu0 0
        %705 = vmatprep.subr.bf16.mxu0 0
        %706 = vmatpush2.bf16.msra.mxu0 0
        %707 = vmatprep.subr.bf16.mxu0 0
        %708 = vmatpush2.bf16.msra.mxu0 0
        %709 = vmatprep.subr.bf16.mxu0 0
        %710 = vmatpush2.bf16.msra.mxu0 0
        %711 = vmatprep.subr.bf16.mxu0 0
        %712 = vmatpush2.bf16.msra.mxu0 0
        %713 = vmatprep.subr.bf16.mxu0 0
        %714 = vmatpush2.bf16.msra.mxu0 0
        %715 = vmatprep.subr.bf16.mxu0 0
        %716 = vmatpush2.bf16.msra.mxu0 0
        %717 = vmatprep.subr.bf16.mxu0 0
        %718 = vmatpush2.bf16.msra.mxu0 0
        %719 = vmatprep.mubr.bf16.mxu0 0
        %720 = vmatmul.mubr.bf16.gmra.mxu0 %v685
        %v721 = vpop.f32.mrf.mxu0
        %v722 = vadd.f32 %v670, %v721
        %v723 = vpop.f32.mrf.mxu0
        %v724 = vpop.f32.mrf.mxu0
        %v725 = vadd.f32 %v670, %v724
        %v726 = vpop.f32.mrf.mxu0
        %727 = vdwg.mxu0
        %v728 = vmul.f32 %v722, 0.35355338
        %v729 = vmul.f32 %v725, 0.35355338
        %732 = vrot.lane.b32.xlu0 %v722, 96
        %v733 = vpop.permute.xlu0 %732
        %734 = vrot.lane.b32.xlu0 %v725, 96
        %v735 = vpop.permute.xlu0 %734
        %vm738 = vcmask 523264
        %739 = vst.msk [vmem:[#allocation2] sm:$0xff] %vm738, %v733
        %740 = vst.msk [vmem:[#allocation2 + $0x8] sm:$0xff] %vm738, %v735
        %v741 = vld [vmem:[#allocation2] ss:$2 sm:$0xff]
        %s742 = scalar_lea.vmem [#allocation2], 1
        %v743 = vld [vmem:[%s742] ss:$2 sm:$0xff]
        %v744 = vadd.f32 %v741, %v743
        %v745 = vmul.f32 %v744, 0.5
        %748 = vrot.lane.b32.xlu0 %v728, 120
        %v749 = vpop.permute.xlu0 %748
        %750 = vrot.lane.b32.xlu0 %v729, 120
        %v751 = vpop.permute.xlu0 %750
        %754 = vrot.lane.b32.xlu0 %v728, 112
        %v755 = vpop.permute.xlu0 %754
        %756 = vrot.lane.b32.xlu0 %v729, 112
        %v757 = vpop.permute.xlu0 %756
        %760 = vrot.lane.b32.xlu0 %v728, 104
        %v761 = vpop.permute.xlu0 %760
        %762 = vrot.lane.b32.xlu0 %v729, 104
        %v763 = vpop.permute.xlu0 %762
        %v766 = vpack.c.bf16 %v729, %v728
        %v767 = vpack.c.bf16 %v751, %v749
        %v768 = vpack.c.bf16 %v757, %v755
        %v769 = vpack.c.bf16 %v763, %v761
        %771 = vrot.lane.b32.xlu0 %v745, 120
        %v772 = vpop.permute.xlu0 %771
        %774 = vrot.lane.b32.xlu0 %v745, 112
        %v775 = vpop.permute.xlu0 %774
        %777 = vrot.lane.b32.xlu0 %v745, 104
        %v778 = vpop.permute.xlu0 %777
        %v780 = vpack.c.bf16 %v745, %v745
        %v781 = vpack.c.bf16 %v772, %v772
        %v782 = vpack.c.bf16 %v775, %v775
        %v783 = vpack.c.bf16 %v778, %v778
        %vm784 = vcmask 64512
        %v786 = vsel %vm784, %v766, 0
        %v789 = vsel %vm784, %v780, 0
        %791 = vmatprep.subr.bf16.mxu0 0
        %792 = vmatpush1.bf16.xpose.msra.mxu0 0
        %793 = vmatprep.subr.bf16.mxu0 0
        %794 = vmatpush1.bf16.xpose.msra.mxu0 0
        %795 = vmatprep.subr.bf16.mxu0 0
        %796 = vmatpush1.bf16.xpose.msra.mxu0 0
        %797 = vmatprep.subr.bf16.mxu0 0
        %798 = vmatpush1.bf16.xpose.msra.mxu0 0
        %799 = vmatprep.subr.bf16.mxu0 0
        %800 = vmatpush1.bf16.xpose.msra.mxu0 0
        %801 = vmatprep.subr.bf16.mxu0 0
        %802 = vmatpush1.bf16.xpose.msra.mxu0 0
        %803 = vmatprep.subr.bf16.mxu0 0
        %804 = vmatpush1.bf16.xpose.msra.mxu0 0
        %805 = vmatprep.subr.bf16.mxu0 0
        %806 = vmatpush1.bf16.xpose.msra.mxu0 %v789
        %807 = vmatprep.subr.bf16.mxu0 0
        %808 = vmatpush2.bf16.xpose.msra.mxu0 0
        %809 = vmatprep.subr.bf16.mxu0 0
        %810 = vmatpush2.bf16.xpose.msra.mxu0 0
        %811 = vmatprep.subr.bf16.mxu0 0
        %812 = vmatpush2.bf16.xpose.msra.mxu0 0
        %813 = vmatprep.subr.bf16.mxu0 0
        %814 = vmatpush2.bf16.xpose.msra.mxu0 0
        %815 = vmatprep.subr.bf16.mxu0 0
        %816 = vmatpush2.bf16.xpose.msra.mxu0 0
        %817 = vmatprep.subr.bf16.mxu0 0
        %818 = vmatpush2.bf16.xpose.msra.mxu0 0
        %819 = vmatprep.subr.bf16.mxu0 0
        %820 = vmatpush2.bf16.xpose.msra.mxu0 0
        %821 = vmatprep.subr.bf16.mxu0 0
        %822 = vmatpush2.bf16.xpose.msra.mxu0 0
        %823 = vmatprep.mubr.bf16.mxu0 0
        %824 = vmatmul.mubr.bf16.gmra.mxu0 %v786
        %v825 = vpop.f32.mrf.mxu0
        %v826 = vadd.f32 0.0, %v825
        %v827 = vpop.f32.mrf.mxu0
        %v828 = vpop.f32.mrf.mxu0
        %v829 = vadd.f32 0.0, %v828
        %v830 = vpop.f32.mrf.mxu0
        %831 = vdwg.mxu0
        %v833 = vsel %vm784, %v767, 0
        %v836 = vsel %vm784, %v781, 0
        %838 = vmatprep.subr.bf16.mxu0 0
        %839 = vmatpush1.bf16.xpose.msra.mxu0 0
        %840 = vmatprep.subr.bf16.mxu0 0
        %841 = vmatpush1.bf16.xpose.msra.mxu0 0
        %842 = vmatprep.subr.bf16.mxu0 0
        %843 = vmatpush1.bf16.xpose.msra.mxu0 0
        %844 = vmatprep.subr.bf16.mxu0 0
        %845 = vmatpush1.bf16.xpose.msra.mxu0 0
        %846 = vmatprep.subr.bf16.mxu0 0
        %847 = vmatpush1.bf16.xpose.msra.mxu0 0
        %848 = vmatprep.subr.bf16.mxu0 0
        %849 = vmatpush1.bf16.xpose.msra.mxu0 0
        %850 = vmatprep.subr.bf16.mxu0 0
        %851 = vmatpush1.bf16.xpose.msra.mxu0 0
        %852 = vmatprep.subr.bf16.mxu0 0
        %853 = vmatpush1.bf16.xpose.msra.mxu0 %v836
        %854 = vmatprep.subr.bf16.mxu0 0
        %855 = vmatpush2.bf16.xpose.msra.mxu0 0
        %856 = vmatprep.subr.bf16.mxu0 0
        %857 = vmatpush2.bf16.xpose.msra.mxu0 0
        %858 = vmatprep.subr.bf16.mxu0 0
        %859 = vmatpush2.bf16.xpose.msra.mxu0 0
        %860 = vmatprep.subr.bf16.mxu0 0
        %861 = vmatpush2.bf16.xpose.msra.mxu0 0
        %862 = vmatprep.subr.bf16.mxu0 0
        %863 = vmatpush2.bf16.xpose.msra.mxu0 0
        %864 = vmatprep.subr.bf16.mxu0 0
        %865 = vmatpush2.bf16.xpose.msra.mxu0 0
        %866 = vmatprep.subr.bf16.mxu0 0
        %867 = vmatpush2.bf16.xpose.msra.mxu0 0
        %868 = vmatprep.subr.bf16.mxu0 0
        %869 = vmatpush2.bf16.xpose.msra.mxu0 0
        %870 = vmatprep.mubr.bf16.mxu0 0
        %871 = vmatmul.mubr.bf16.gmra.mxu0 %v833
        %v872 = vpop.f32.mrf.mxu0
        %v873 = vadd.f32 0.0, %v872
        %v874 = vpop.f32.mrf.mxu0
        %v875 = vpop.f32.mrf.mxu0
        %v876 = vadd.f32 0.0, %v875
        %v877 = vpop.f32.mrf.mxu0
        %878 = vdwg.mxu0
        %v880 = vsel %vm784, %v768, 0
        %v883 = vsel %vm784, %v782, 0
        %885 = vmatprep.subr.bf16.mxu0 0
        %886 = vmatpush1.bf16.xpose.msra.mxu0 0
        %887 = vmatprep.subr.bf16.mxu0 0
        %888 = vmatpush1.bf16.xpose.msra.mxu0 0
        %889 = vmatprep.subr.bf16.mxu0 0
        %890 = vmatpush1.bf16.xpose.msra.mxu0 0
        %891 = vmatprep.subr.bf16.mxu0 0
        %892 = vmatpush1.bf16.xpose.msra.mxu0 0
        %893 = vmatprep.subr.bf16.mxu0 0
        %894 = vmatpush1.bf16.xpose.msra.mxu0 0
        %895 = vmatprep.subr.bf16.mxu0 0
        %896 = vmatpush1.bf16.xpose.msra.mxu0 0
        %897 = vmatprep.subr.bf16.mxu0 0
        %898 = vmatpush1.bf16.xpose.msra.mxu0 0
        %899 = vmatprep.subr.bf16.mxu0 0
        %900 = vmatpush1.bf16.xpose.msra.mxu0 %v883
        %901 = vmatprep.subr.bf16.mxu0 0
        %902 = vmatpush2.bf16.xpose.msra.mxu0 0
        %903 = vmatprep.subr.bf16.mxu0 0
        %904 = vmatpush2.bf16.xpose.msra.mxu0 0
        %905 = vmatprep.subr.bf16.mxu0 0
        %906 = vmatpush2.bf16.xpose.msra.mxu0 0
        %907 = vmatprep.subr.bf16.mxu0 0
        %908 = vmatpush2.bf16.xpose.msra.mxu0 0
        %909 = vmatprep.subr.bf16.mxu0 0
        %910 = vmatpush2.bf16.xpose.msra.mxu0 0
        %911 = vmatprep.subr.bf16.mxu0 0
        %912 = vmatpush2.bf16.xpose.msra.mxu0 0
        %913 = vmatprep.subr.bf16.mxu0 0
        %914 = vmatpush2.bf16.xpose.msra.mxu0 0
        %915 = vmatprep.subr.bf16.mxu0 0
        %916 = vmatpush2.bf16.xpose.msra.mxu0 0
        %917 = vmatprep.mubr.bf16.mxu0 0
        %918 = vmatmul.mubr.bf16.gmra.mxu0 %v880
        %v919 = vpop.f32.mrf.mxu0
        %v920 = vadd.f32 0.0, %v919
        %v921 = vpop.f32.mrf.mxu0
        %v922 = vpop.f32.mrf.mxu0
        %v923 = vadd.f32 0.0, %v922
        %v924 = vpop.f32.mrf.mxu0
        %925 = vdwg.mxu0
        %v927 = vsel %vm784, %v769, 0
        %v930 = vsel %vm784, %v783, 0
        %932 = vmatprep.subr.bf16.mxu0 0
        %933 = vmatpush1.bf16.xpose.msra.mxu0 0
        %934 = vmatprep.subr.bf16.mxu0 0
        %935 = vmatpush1.bf16.xpose.msra.mxu0 0
        %936 = vmatprep.subr.bf16.mxu0 0
        %937 = vmatpush1.bf16.xpose.msra.mxu0 0
        %938 = vmatprep.subr.bf16.mxu0 0
        %939 = vmatpush1.bf16.xpose.msra.mxu0 0
        %940 = vmatprep.subr.bf16.mxu0 0
        %941 = vmatpush1.bf16.xpose.msra.mxu0 0
        %942 = vmatprep.subr.bf16.mxu0 0
        %943 = vmatpush1.bf16.xpose.msra.mxu0 0
        %944 = vmatprep.subr.bf16.mxu0 0
        %945 = vmatpush1.bf16.xpose.msra.mxu0 0
        %946 = vmatprep.subr.bf16.mxu0 0
        %947 = vmatpush1.bf16.xpose.msra.mxu0 %v930
        %948 = vmatprep.subr.bf16.mxu0 0
        %949 = vmatpush2.bf16.xpose.msra.mxu0 0
        %950 = vmatprep.subr.bf16.mxu0 0
        %951 = vmatpush2.bf16.xpose.msra.mxu0 0
        %952 = vmatprep.subr.bf16.mxu0 0
        %953 = vmatpush2.bf16.xpose.msra.mxu0 0
        %954 = vmatprep.subr.bf16.mxu0 0
        %955 = vmatpush2.bf16.xpose.msra.mxu0 0
        %956 = vmatprep.subr.bf16.mxu0 0
        %957 = vmatpush2.bf16.xpose.msra.mxu0 0
        %958 = vmatprep.subr.bf16.mxu0 0
        %959 = vmatpush2.bf16.xpose.msra.mxu0 0
        %960 = vmatprep.subr.bf16.mxu0 0
        %961 = vmatpush2.bf16.xpose.msra.mxu0 0
        %962 = vmatprep.subr.bf16.mxu0 0
        %963 = vmatpush2.bf16.xpose.msra.mxu0 0
        %964 = vmatprep.mubr.bf16.mxu0 0
        %965 = vmatmul.mubr.bf16.gmra.mxu0 %v927
        %v966 = vpop.f32.mrf.mxu0
        %v967 = vadd.f32 0.0, %v966
        %v968 = vpop.f32.mrf.mxu0
        %v969 = vpop.f32.mrf.mxu0
        %v970 = vadd.f32 0.0, %v969
        %v971 = vpop.f32.mrf.mxu0
        %972 = vdwg.mxu0
        %v973 = vsel %vm784, %v826, -inf
        %974 = vmax.xlane.f32.xlu0 %v973
        %v975 = vpop.xlane.xlu0 %974
        %v976 = vsel %vm784, %v829, -inf
        %977 = vmax.xlane.f32.xlu0 %v976
        %v978 = vpop.xlane.xlu0 %977
        %v979 = vsel %vm784, %v873, -inf
        %980 = vmax.xlane.f32.xlu0 %v979
        %v981 = vpop.xlane.xlu0 %980
        %v982 = vsel %vm784, %v876, -inf
        %983 = vmax.xlane.f32.xlu0 %v982
        %v984 = vpop.xlane.xlu0 %983
        %v985 = vsel %vm784, %v920, -inf
        %986 = vmax.xlane.f32.xlu0 %v985
        %v987 = vpop.xlane.xlu0 %986
        %v988 = vsel %vm784, %v923, -inf
        %989 = vmax.xlane.f32.xlu0 %v988
        %v990 = vpop.xlane.xlu0 %989
        %v991 = vsel %vm784, %v967, -inf
        %992 = vmax.xlane.f32.xlu0 %v991
        %v993 = vpop.xlane.xlu0 %992
        %v994 = vsel %vm784, %v970, -inf
        %995 = vmax.xlane.f32.xlu0 %v994
        %v996 = vpop.xlane.xlu0 %995
        %v997 = vsub.f32 %v826, %v975
        %v998 = vsub.f32 %v829, %v978
        %v999 = vsub.f32 %v873, %v981
        %v1000 = vsub.f32 %v876, %v984
        %v1001 = vsub.f32 %v920, %v987
        %v1002 = vsub.f32 %v923, %v990
        %v1003 = vsub.f32 %v967, %v993
        %v1004 = vsub.f32 %v970, %v996
        %v1005 = vmul.f32 %v997, 1.442695
        %v1006 = vpow.pop %v1005
        %v1007 = vmul.f32 %v998, 1.442695
        %v1008 = vpow.pop %v1007
        %v1009 = vmul.f32 %v999, 1.442695
        %v1010 = vpow.pop %v1009
        %v1011 = vmul.f32 %v1000, 1.442695
        %v1012 = vpow.pop %v1011
        %v1013 = vmul.f32 %v1001, 1.442695
        %v1014 = vpow.pop %v1013
        %v1015 = vmul.f32 %v1002, 1.442695
        %v1016 = vpow.pop %v1015
        %v1017 = vmul.f32 %v1003, 1.442695
        %v1018 = vpow.pop %v1017
        %v1019 = vmul.f32 %v1004, 1.442695
        %v1020 = vpow.pop %v1019
        %v1021 = vsel %vm784, %v1006, 0.0
        %1022 = vadd.xlane.f32.xlu0 %v1021
        %v1023 = vpop.xlane.xlu0 %1022
        %v1024 = vsel %vm784, %v1008, 0.0
        %1025 = vadd.xlane.f32.xlu0 %v1024
        %v1026 = vpop.xlane.xlu0 %1025
        %v1027 = vsel %vm784, %v1010, 0.0
        %1028 = vadd.xlane.f32.xlu0 %v1027
        %v1029 = vpop.xlane.xlu0 %1028
        %v1030 = vsel %vm784, %v1012, 0.0
        %1031 = vadd.xlane.f32.xlu0 %v1030
        %v1032 = vpop.xlane.xlu0 %1031
        %v1033 = vsel %vm784, %v1014, 0.0
        %1034 = vadd.xlane.f32.xlu0 %v1033
        %v1035 = vpop.xlane.xlu0 %1034
        %v1036 = vsel %vm784, %v1016, 0.0
        %1037 = vadd.xlane.f32.xlu0 %v1036
        %v1038 = vpop.xlane.xlu0 %1037
        %v1039 = vsel %vm784, %v1018, 0.0
        %1040 = vadd.xlane.f32.xlu0 %v1039
        %v1041 = vpop.xlane.xlu0 %1040
        %v1042 = vsel %vm784, %v1020, 0.0
        %1043 = vadd.xlane.f32.xlu0 %v1042
        %v1044 = vpop.xlane.xlu0 %1043
        %v1045 = vrcp.pop %v1023
        %v1046 = vmul.f32 %v1006, %v1045
        %v1047 = vrcp.pop %v1026
        %v1048 = vmul.f32 %v1008, %v1047
        %v1049 = vrcp.pop %v1029
        %v1050 = vmul.f32 %v1010, %v1049
        %v1051 = vrcp.pop %v1032
        %v1052 = vmul.f32 %v1012, %v1051
        %v1053 = vrcp.pop %v1035
        %v1054 = vmul.f32 %v1014, %v1053
        %v1055 = vrcp.pop %v1038
        %v1056 = vmul.f32 %v1016, %v1055
        %v1057 = vrcp.pop %v1041
        %v1058 = vmul.f32 %v1018, %v1057
        %v1059 = vrcp.pop %v1044
        %v1060 = vmul.f32 %v1020, %v1059
        %v1061 = vpack.c.bf16 %v1048, %v1046
        %v1062 = vpack.c.bf16 %v1052, %v1050
        %v1063 = vpack.c.bf16 %v1056, %v1054
        %v1064 = vpack.c.bf16 %v1060, %v1058
        %1066 = vrot.lane.b32.xlu0 %v780, 96
        %v1067 = vpop.permute.xlu0 %1066
        %v1069 = vsel %vm784, %v1061, 0
        %vm1071 = vcmask 1043456
        %v1073 = vsel %vm1071, %v1067, 0
        %1075 = vmatprep.subr.bf16.mxu0 0
        %1076 = vmatpush1.bf16.msra.mxu0 0
        %1077 = vmatprep.subr.bf16.mxu0 0
        %1078 = vmatpush1.bf16.msra.mxu0 0
        %1079 = vmatprep.subr.bf16.mxu0 0
        %1080 = vmatpush1.bf16.msra.mxu0 0
        %1081 = vmatprep.subr.bf16.mxu0 0
        %1082 = vmatpush1.bf16.msra.mxu0 0
        %1083 = vmatprep.subr.bf16.mxu0 0
        %1084 = vmatpush1.bf16.msra.mxu0 0
        %1085 = vmatprep.subr.bf16.mxu0 0
        %1086 = vmatpush1.bf16.msra.mxu0 0
        %1087 = vmatprep.subr.bf16.mxu0 0
        %1088 = vmatpush1.bf16.msra.mxu0 0
        %1089 = vmatprep.subr.bf16.mxu0 0
        %1090 = vmatpush1.bf16.msra.mxu0 %v1073
        %1091 = vmatprep.subr.bf16.mxu0 0
        %1092 = vmatpush2.bf16.msra.mxu0 0
        %1093 = vmatprep.subr.bf16.mxu0 0
        %1094 = vmatpush2.bf16.msra.mxu0 0
        %1095 = vmatprep.subr.bf16.mxu0 0
        %1096 = vmatpush2.bf16.msra.mxu0 0
        %1097 = vmatprep.subr.bf16.mxu0 0
        %1098 = vmatpush2.bf16.msra.mxu0 0
        %1099 = vmatprep.subr.bf16.mxu0 0
        %1100 = vmatpush2.bf16.msra.mxu0 0
        %1101 = vmatprep.subr.bf16.mxu0 0
        %1102 = vmatpush2.bf16.msra.mxu0 0
        %1103 = vmatprep.subr.bf16.mxu0 0
        %1104 = vmatpush2.bf16.msra.mxu0 0
        %1105 = vmatprep.subr.bf16.mxu0 0
        %1106 = vmatpush2.bf16.msra.mxu0 0
        %1107 = vmatprep.mubr.bf16.mxu0 0
        %1108 = vmatmul.mubr.bf16.gmra.mxu0 %v1069
        %v1109 = vpop.f32.mrf.mxu0
        %v1110 = vadd.f32 0.0, %v1109
        %v1111 = vpop.f32.mrf.mxu0
        %v1112 = vpop.f32.mrf.mxu0
        %v1113 = vadd.f32 0.0, %v1112
        %v1114 = vpop.f32.mrf.mxu0
        %1115 = vdwg.mxu0
        %1117 = vrot.lane.b32.xlu0 %v781, 96
        %v1118 = vpop.permute.xlu0 %1117
        %v1120 = vsel %vm784, %v1062, 0
        %v1123 = vsel %vm1071, %v1118, 0
        %1125 = vmatprep.subr.bf16.mxu0 0
        %1126 = vmatpush1.bf16.msra.mxu0 0
        %1127 = vmatprep.subr.bf16.mxu0 0
        %1128 = vmatpush1.bf16.msra.mxu0 0
        %1129 = vmatprep.subr.bf16.mxu0 0
        %1130 = vmatpush1.bf16.msra.mxu0 0
        %1131 = vmatprep.subr.bf16.mxu0 0
        %1132 = vmatpush1.bf16.msra.mxu0 0
        %1133 = vmatprep.subr.bf16.mxu0 0
        %1134 = vmatpush1.bf16.msra.mxu0 0
        %1135 = vmatprep.subr.bf16.mxu0 0
        %1136 = vmatpush1.bf16.msra.mxu0 0
        %1137 = vmatprep.subr.bf16.mxu0 0
        %1138 = vmatpush1.bf16.msra.mxu0 0
        %1139 = vmatprep.subr.bf16.mxu0 0
        %1140 = vmatpush1.bf16.msra.mxu0 %v1123
        %1141 = vmatprep.subr.bf16.mxu0 0
        %1142 = vmatpush2.bf16.msra.mxu0 0
        %1143 = vmatprep.subr.bf16.mxu0 0
        %1144 = vmatpush2.bf16.msra.mxu0 0
        %1145 = vmatprep.subr.bf16.mxu0 0
        %1146 = vmatpush2.bf16.msra.mxu0 0
        %1147 = vmatprep.subr.bf16.mxu0 0
        %1148 = vmatpush2.bf16.msra.mxu0 0
        %1149 = vmatprep.subr.bf16.mxu0 0
        %1150 = vmatpush2.bf16.msra.mxu0 0
        %1151 = vmatprep.subr.bf16.mxu0 0
        %1152 = vmatpush2.bf16.msra.mxu0 0
        %1153 = vmatprep.subr.bf16.mxu0 0
        %1154 = vmatpush2.bf16.msra.mxu0 0
        %1155 = vmatprep.subr.bf16.mxu0 0
        %1156 = vmatpush2.bf16.msra.mxu0 0
        %1157 = vmatprep.mubr.bf16.mxu0 0
        %1158 = vmatmul.mubr.bf16.gmra.mxu0 %v1120
        %v1159 = vpop.f32.mrf.mxu0
        %v1160 = vadd.f32 0.0, %v1159
        %v1161 = vpop.f32.mrf.mxu0
        %v1162 = vpop.f32.mrf.mxu0
        %v1163 = vadd.f32 0.0, %v1162
        %v1164 = vpop.f32.mrf.mxu0
        %1165 = vdwg.mxu0
        %1167 = vrot.lane.b32.xlu0 %v782, 96
        %v1168 = vpop.permute.xlu0 %1167
        %v1170 = vsel %vm784, %v1063, 0
        %v1173 = vsel %vm1071, %v1168, 0
        %1175 = vmatprep.subr.bf16.mxu0 0
        %1176 = vmatpush1.bf16.msra.mxu0 0
        %1177 = vmatprep.subr.bf16.mxu0 0
        %1178 = vmatpush1.bf16.msra.mxu0 0
        %1179 = vmatprep.subr.bf16.mxu0 0
        %1180 = vmatpush1.bf16.msra.mxu0 0
        %1181 = vmatprep.subr.bf16.mxu0 0
        %1182 = vmatpush1.bf16.msra.mxu0 0
        %1183 = vmatprep.subr.bf16.mxu0 0
        %1184 = vmatpush1.bf16.msra.mxu0 0
        %1185 = vmatprep.subr.bf16.mxu0 0
        %1186 = vmatpush1.bf16.msra.mxu0 0
        %1187 = vmatprep.subr.bf16.mxu0 0
        %1188 = vmatpush1.bf16.msra.mxu0 0
        %1189 = vmatprep.subr.bf16.mxu0 0
        %1190 = vmatpush1.bf16.msra.mxu0 %v1173
        %1191 = vmatprep.subr.bf16.mxu0 0
        %1192 = vmatpush2.bf16.msra.mxu0 0
        %1193 = vmatprep.subr.bf16.mxu0 0
        %1194 = vmatpush2.bf16.msra.mxu0 0
        %1195 = vmatprep.subr.bf16.mxu0 0
        %1196 = vmatpush2.bf16.msra.mxu0 0
        %1197 = vmatprep.subr.bf16.mxu0 0
        %1198 = vmatpush2.bf16.msra.mxu0 0
        %1199 = vmatprep.subr.bf16.mxu0 0
        %1200 = vmatpush2.bf16.msra.mxu0 0
        %1201 = vmatprep.subr.bf16.mxu0 0
        %1202 = vmatpush2.bf16.msra.mxu0 0
        %1203 = vmatprep.subr.bf16.mxu0 0
        %1204 = vmatpush2.bf16.msra.mxu0 0
        %1205 = vmatprep.subr.bf16.mxu0 0
        %1206 = vmatpush2.bf16.msra.mxu0 0
        %1207 = vmatprep.mubr.bf16.mxu0 0
        %1208 = vmatmul.mubr.bf16.gmra.mxu0 %v1170
        %v1209 = vpop.f32.mrf.mxu0
        %v1210 = vadd.f32 0.0, %v1209
        %v1211 = vpop.f32.mrf.mxu0
        %v1212 = vpop.f32.mrf.mxu0
        %v1213 = vadd.f32 0.0, %v1212
        %v1214 = vpop.f32.mrf.mxu0
        %1215 = vdwg.mxu0
        %1217 = vrot.lane.b32.xlu0 %v783, 96
        %v1218 = vpop.permute.xlu0 %1217
        %v1220 = vsel %vm784, %v1064, 0
        %v1223 = vsel %vm1071, %v1218, 0
        %1225 = vmatprep.subr.bf16.mxu0 0
        %1226 = vmatpush1.bf16.msra.mxu0 0
        %1227 = vmatprep.subr.bf16.mxu0 0
        %1228 = vmatpush1.bf16.msra.mxu0 0
        %1229 = vmatprep.subr.bf16.mxu0 0
        %1230 = vmatpush1.bf16.msra.mxu0 0
        %1231 = vmatprep.subr.bf16.mxu0 0
        %1232 = vmatpush1.bf16.msra.mxu0 0
        %1233 = vmatprep.subr.bf16.mxu0 0
        %1234 = vmatpush1.bf16.msra.mxu0 0
        %1235 = vmatprep.subr.bf16.mxu0 0
        %1236 = vmatpush1.bf16.msra.mxu0 0
        %1237 = vmatprep.subr.bf16.mxu0 0
        %1238 = vmatpush1.bf16.msra.mxu0 0
        %1239 = vmatprep.subr.bf16.mxu0 0
        %1240 = vmatpush1.bf16.msra.mxu0 %v1223
        %1241 = vmatprep.subr.bf16.mxu0 0
        %1242 = vmatpush2.bf16.msra.mxu0 0
        %1243 = vmatprep.subr.bf16.mxu0 0
        %1244 = vmatpush2.bf16.msra.mxu0 0
        %1245 = vmatprep.subr.bf16.mxu0 0
        %1246 = vmatpush2.bf16.msra.mxu0 0
        %1247 = vmatprep.subr.bf16.mxu0 0
        %1248 = vmatpush2.bf16.msra.mxu0 0
        %1249 = vmatprep.subr.bf16.mxu0 0
        %1250 = vmatpush2.bf16.msra.mxu0 0
        %1251 = vmatprep.subr.bf16.mxu0 0
        %1252 = vmatpush2.bf16.msra.mxu0 0
        %1253 = vmatprep.subr.bf16.mxu0 0
        %1254 = vmatpush2.bf16.msra.mxu0 0
        %1255 = vmatprep.subr.bf16.mxu0 0
        %1256 = vmatpush2.bf16.msra.mxu0 0
        %1257 = vmatprep.mubr.bf16.mxu0 0
        %1258 = vmatmul.mubr.bf16.gmra.mxu0 %v1220
        %v1259 = vpop.f32.mrf.mxu0
        %v1260 = vadd.f32 0.0, %v1259
        %v1261 = vpop.f32.mrf.mxu0
        %v1262 = vpop.f32.mrf.mxu0
        %v1263 = vadd.f32 0.0, %v1262
        %v1264 = vpop.f32.mrf.mxu0
        %1265 = vdwg.mxu0
        %1268 = vrot.lane.b32.xlu0 %v1160, 8
        %v1269 = vpop.permute.xlu0 %1268
        %1270 = vrot.lane.b32.xlu0 %v1163, 8
        %v1271 = vpop.permute.xlu0 %1270
        %1276 = vrot.lane.b32.xlu0 %v1210, 16
        %v1277 = vpop.permute.xlu0 %1276
        %1278 = vrot.lane.b32.xlu0 %v1213, 16
        %v1279 = vpop.permute.xlu0 %1278
        %1284 = vrot.lane.b32.xlu0 %v1260, 24
        %v1285 = vpop.permute.xlu0 %1284
        %1286 = vrot.lane.b32.xlu0 %v1263, 24
        %v1287 = vpop.permute.xlu0 %1286
        %v1290 = vsel %vm784, %v1110, %v1269
        %v1291 = vsel %vm784, %v1113, %v1271
        %v1292 = vsel %vm569, %v1290, %v1277
        %v1293 = vsel %vm569, %v1291, %v1279
        %vm1294 = vcmask 195584
        %v1295 = vsel %vm1294, %v1292, %v1285
        %v1296 = vsel %vm1294, %v1293, %v1287
        %v1297 = vpack.c.bf16 %v1296, %v1295
        %v1298 = vld [vmem:[%s7] sm:$0xf]
        %v1299 = vld [vmem:[%s7 + $0x4] sm:$0xf]
        %v1300 = vld [vmem:[%s7 + $0x8] sm:$0xf]
        %v1301 = vld [vmem:[%s7 + $0xc] sm:$0xf]
        %v1302 = vld [vmem:[%s8] sm:$0x1]
        %v1304 = vlaneseq
        %v1305 = vshrl.u32 %v1304, 7
        %v1306 = vsub.s32 0, %v1305
        %v1307 = vrot.slane %v1302, %v1306
        %v1313 = vunpack.c.l.b16 %v1298
        %v1314 = vunpack.c.l.b16 %v1299
        %v1315 = vunpack.c.l.b16 %v1300
        %v1316 = vunpack.c.l.b16 %v1301
        %v1317 = vpack.c.b16 %v1314, %v1313
        %v1318 = vpack.c.b16 %v1316, %v1315
        %v1322 = vsel %vm616, %v1297, 0
        %1324 = vmatprep.subr.bf16.mxu0 0
        %1325 = vmatpush1.bf16.msra.mxu0 0
        %1326 = vmatprep.subr.bf16.mxu0 0
        %1327 = vmatpush1.bf16.msra.mxu0 0
        %1328 = vmatprep.subr.bf16.mxu0 0
        %1329 = vmatpush1.bf16.msra.mxu0 0
        %1330 = vmatprep.subr.bf16.mxu0 0
        %1331 = vmatpush1.bf16.msra.mxu0 0
        %1332 = vmatprep.subr.bf16.mxu0 0
        %1333 = vmatpush1.bf16.msra.mxu0 0
        %1334 = vmatprep.subr.bf16.mxu0 0
        %1335 = vmatpush1.bf16.msra.mxu0 0
        %1336 = vmatprep.subr.bf16.mxu0 0
        %1337 = vmatpush1.bf16.msra.mxu0 %v1318
        %1338 = vmatprep.subr.bf16.mxu0 0
        %1339 = vmatpush1.bf16.msra.mxu0 %v1317
        %1340 = vmatprep.subr.bf16.mxu0 0
        %1341 = vmatpush2.bf16.msra.mxu0 0
        %1342 = vmatprep.subr.bf16.mxu0 0
        %1343 = vmatpush2.bf16.msra.mxu0 0
        %1344 = vmatprep.subr.bf16.mxu0 0
        %1345 = vmatpush2.bf16.msra.mxu0 0
        %1346 = vmatprep.subr.bf16.mxu0 0
        %1347 = vmatpush2.bf16.msra.mxu0 0
        %1348 = vmatprep.subr.bf16.mxu0 0
        %1349 = vmatpush2.bf16.msra.mxu0 0
        %1350 = vmatprep.subr.bf16.mxu0 0
        %1351 = vmatpush2.bf16.msra.mxu0 0
        %1352 = vmatprep.subr.bf16.mxu0 0
        %1353 = vmatpush2.bf16.msra.mxu0 0
        %1354 = vmatprep.subr.bf16.mxu0 0
        %1355 = vmatpush2.bf16.msra.mxu0 0
        %1356 = vmatprep.mubr.bf16.mxu0 0
        %1357 = vmatmul.mubr.bf16.gmra.mxu0 %v1322
        %v1358 = vpop.f32.mrf.mxu0
        %v1359 = vadd.f32 %v1307, %v1358
        %v1360 = vpop.f32.mrf.mxu0
        %v1361 = vpop.f32.mrf.mxu0
        %v1362 = vadd.f32 %v1307, %v1361
        %v1363 = vpop.f32.mrf.mxu0
        %1364 = vdwg.mxu0
        %v1365 = vadd.f32 %v608, %v1359
        %v1366 = vadd.f32 %v611, %v1362
        %v1367 = vld [vmem:[%s9] sm:$0x1]
        %v1368 = vld [vmem:[%s10] sm:$0x1]
        %v1369 = vsel %vm616, %v1365, 0.0
        %1370 = vadd.xlane.f32.xlu0 %v1369
        %v1371 = vpop.xlane.xlu0 %1370
        %v1372 = vsel %vm616, %v1366, 0.0
        %1373 = vadd.xlane.f32.xlu0 %v1372
        %v1374 = vpop.xlane.xlu0 %1373
        %v1375 = vmul.f32 %v1371, %v623
        %v1376 = vmul.f32 %v1374, %v623
        %v1377 = vsub.f32 %v1365, %v1375
        %v1378 = vsub.f32 %v1366, %v1376
        %v1379 = vmul.f32 %v1377, %v1377
        %v1380 = vmul.f32 %v1378, %v1378
        %v1381 = vsel %vm616, %v1379, 0.0
        %1382 = vadd.xlane.f32.xlu0 %v1381
        %v1383 = vpop.xlane.xlu0 %1382
        %v1384 = vsel %vm616, %v1380, 0.0
        %1385 = vadd.xlane.f32.xlu0 %v1384
        %v1386 = vpop.xlane.xlu0 %1385
        %v1387 = vmul.f32 %v1383, %v623
        %v1388 = vmul.f32 %v1386, %v623
        %v1389 = vadd.f32 %v1387, 1e-05
        %v1390 = vadd.f32 %v1388, 1e-05
        %v1391 = vrsqrt.pop %v1389
        %v1392 = vrsqrt.pop %v1390
        %v1393 = vmul.f32 %v1377, %v1391
        %v1394 = vmul.f32 %v1378, %v1392
        %v1396 = vlaneseq
        %v1397 = vshrl.u32 %v1396, 7
        %v1398 = vsub.s32 0, %v1397
        %v1399 = vrot.slane %v1367, %v1398
        %v1401 = vmul.f32 %v1393, %v1399
        %v1402 = vmul.f32 %v1394, %v1399
        %v1404 = vlaneseq
        %v1405 = vshrl.u32 %v1404, 7
        %v1406 = vsub.s32 0, %v1405
        %v1407 = vrot.slane %v1368, %v1406
        %v1409 = vadd.f32 %v1401, %v1407
        %v1410 = vadd.f32 %v1402, %v1407
        %v1411 = vpack.c.bf16 %v1410, %v1409
        %v1412 = vld [vmem:[%s11] sm:$0xf]
        %v1413 = vld [vmem:[%s11 + $0x4] sm:$0xf]
        %v1414 = vld [vmem:[%s11 + $0x8] sm:$0xf]
        %v1415 = vld [vmem:[%s11 + $0xc] sm:$0xf]
        %v1416 = vld [vmem:[%s12] sm:$0x1]
        %v1418 = vlaneseq
        %v1419 = vshrl.u32 %v1418, 7
        %v1420 = vsub.s32 0, %v1419
        %v1421 = vrot.slane %v1416, %v1420
        %v1427 = vunpack.c.l.b16 %v1412
        %v1428 = vunpack.c.l.b16 %v1413
        %v1429 = vunpack.c.l.b16 %v1414
        %v1430 = vunpack.c.l.b16 %v1415
        %v1431 = vpack.c.b16 %v1428, %v1427
        %v1432 = vpack.c.b16 %v1430, %v1429
        %v1436 = vsel %vm616, %v1411, 0
        %1438 = vmatprep.subr.bf16.mxu0 0
        %1439 = vmatpush1.bf16.msra.mxu0 0
        %1440 = vmatprep.subr.bf16.mxu0 0
        %1441 = vmatpush1.bf16.msra.mxu0 0
        %1442 = vmatprep.subr.bf16.mxu0 0
        %1443 = vmatpush1.bf16.msra.mxu0 0
        %1444 = vmatprep.subr.bf16.mxu0 0
        %1445 = vmatpush1.bf16.msra.mxu0 0
        %1446 = vmatprep.subr.bf16.mxu0 0
        %1447 = vmatpush1.bf16.msra.mxu0 0
        %1448 = vmatprep.subr.bf16.mxu0 0
        %1449 = vmatpush1.bf16.msra.mxu0 0
        %1450 = vmatprep.subr.bf16.mxu0 0
        %1451 = vmatpush1.bf16.msra.mxu0 %v1432
        %1452 = vmatprep.subr.bf16.mxu0 0
        %1453 = vmatpush1.bf16.msra.mxu0 %v1431
        %1454 = vmatprep.subr.bf16.mxu0 0
        %1455 = vmatpush2.bf16.msra.mxu0 0
        %1456 = vmatprep.subr.bf16.mxu0 0
        %1457 = vmatpush2.bf16.msra.mxu0 0
        %1458 = vmatprep.subr.bf16.mxu0 0
        %1459 = vmatpush2.bf16.msra.mxu0 0
        %1460 = vmatprep.subr.bf16.mxu0 0
        %1461 = vmatpush2.bf16.msra.mxu0 0
        %1462 = vmatprep.subr.bf16.mxu0 0
        %1463 = vmatpush2.bf16.msra.mxu0 0
        %1464 = vmatprep.subr.bf16.mxu0 0
        %1465 = vmatpush2.bf16.msra.mxu0 0
        %1466 = vmatprep.subr.bf16.mxu0 0
        %1467 = vmatpush2.bf16.msra.mxu0 0
        %1468 = vmatprep.subr.bf16.mxu0 0
        %1469 = vmatpush2.bf16.msra.mxu0 0
        %1470 = vmatprep.mubr.bf16.mxu0 0
        %1471 = vmatmul.mubr.bf16.gmra.mxu0 %v1436
        %v1472 = vpop.f32.mrf.mxu0
        %v1473 = vadd.f32 %v1421, %v1472
        %v1474 = vpop.f32.mrf.mxu0
        %v1475 = vpop.f32.mrf.mxu0
        %v1476 = vadd.f32 %v1421, %v1475
        %v1477 = vpop.f32.mrf.mxu0
        %1478 = vdwg.mxu0
        %v1479 = vmul.f32 %v1473, 0.5
        %v1480 = vmul.f32 %v1476, 0.5
        %v1481 = vmul.f32 %v1473, 0.044715
        %v1482 = vmul.f32 %v1476, 0.044715
        %v1483 = vmul.f32 %v1481, %v1473
        %v1484 = vmul.f32 %v1482, %v1476
        %v1485 = vmul.f32 %v1483, %v1473
        %v1486 = vmul.f32 %v1484, %v1476
        %v1487 = vadd.f32 %v1473, %v1485
        %v1488 = vadd.f32 %v1476, %v1486
        %v1489 = vmul.f32 %v1487, 0.7978846
        %v1490 = vmul.f32 %v1488, 0.7978846
        %v1491 = vtanh.pop %v1489
        %v1492 = vtanh.pop %v1490
        %v1493 = vadd.f32 %v1491, 1.0
        %v1494 = vadd.f32 %v1492, 1.0
        %v1495 = vmul.f32 %v1479, %v1493
        %v1496 = vmul.f32 %v1480, %v1494
        %v1497 = vpack.c.bf16 %v1496, %v1495
        %v1498 = vld [vmem:[%s13] sm:$0xf]
        %v1499 = vld [vmem:[%s13 + $0x4] sm:$0xf]
        %v1500 = vld [vmem:[%s13 + $0x8] sm:$0xf]
        %v1501 = vld [vmem:[%s13 + $0xc] sm:$0xf]
        %v1502 = vld [vmem:[%s13 + $0x10] sm:$0xf]
        %v1503 = vld [vmem:[%s13 + $0x14] sm:$0xf]
        %v1504 = vld [vmem:[%s13 + $0x18] sm:$0xf]
        %v1505 = vld [vmem:[%s13 + $0x1c] sm:$0xf]
        %v1506 = vld [vmem:[%s13 + $0x20] sm:$0xf]
        %v1507 = vld [vmem:[%s13 + $0x24] sm:$0xf]
        %v1508 = vld [vmem:[%s13 + $0x28] sm:$0xf]
        %v1509 = vld [vmem:[%s13 + $0x2c] sm:$0xf]
        %v1510 = vld [vmem:[%s13 + $0x30] sm:$0xf]
        %v1511 = vld [vmem:[%s13 + $0x34] sm:$0xf]
        %v1512 = vld [vmem:[%s13 + $0x38] sm:$0xf]
        %v1513 = vld [vmem:[%s13 + $0x3c] sm:$0xf]
        %v1514 = vld [vmem:[%s14] sm:$0x1]
        %v1516 = vlaneseq
        %v1517 = vshrl.u32 %v1516, 7
        %v1518 = vsub.s32 0, %v1517
        %v1519 = vrot.slane %v1514, %v1518
        %v1537 = vunpack.c.l.b16 %v1498
        %v1538 = vunpack.c.l.b16 %v1499
        %v1539 = vunpack.c.l.b16 %v1500
        %v1540 = vunpack.c.l.b16 %v1501
        %v1541 = vunpack.c.l.b16 %v1502
        %v1542 = vunpack.c.l.b16 %v1503
        %v1543 = vunpack.c.l.b16 %v1504
        %v1544 = vunpack.c.l.b16 %v1505
        %v1545 = vunpack.c.l.b16 %v1506
        %v1546 = vunpack.c.l.b16 %v1507
        %v1547 = vunpack.c.l.b16 %v1508
        %v1548 = vunpack.c.l.b16 %v1509
        %v1549 = vunpack.c.l.b16 %v1510
        %v1550 = vunpack.c.l.b16 %v1511
        %v1551 = vunpack.c.l.b16 %v1512
        %v1552 = vunpack.c.l.b16 %v1513
        %v1553 = vpack.c.b16 %v1538, %v1537
        %v1554 = vpack.c.b16 %v1540, %v1539
        %v1555 = vpack.c.b16 %v1542, %v1541
        %v1556 = vpack.c.b16 %v1544, %v1543
        %v1557 = vpack.c.b16 %v1546, %v1545
        %v1558 = vpack.c.b16 %v1548, %v1547
        %v1559 = vpack.c.b16 %v1550, %v1549
        %v1560 = vpack.c.b16 %v1552, %v1551
        %1569 = vmatprep.subr.bf16.mxu0 0
        %1570 = vmatpush1.bf16.msra.mxu0 %v1560
        %1571 = vmatprep.subr.bf16.mxu0 0
        %1572 = vmatpush1.bf16.msra.mxu0 %v1559
        %1573 = vmatprep.subr.bf16.mxu0 0
        %1574 = vmatpush1.bf16.msra.mxu0 %v1558
        %1575 = vmatprep.subr.bf16.mxu0 0
        %1576 = vmatpush1.bf16.msra.mxu0 %v1557
        %1577 = vmatprep.subr.bf16.mxu0 0
        %1578 = vmatpush1.bf16.msra.mxu0 %v1556
        %1579 = vmatprep.subr.bf16.mxu0 0
        %1580 = vmatpush1.bf16.msra.mxu0 %v1555
        %1581 = vmatprep.subr.bf16.mxu0 0
        %1582 = vmatpush1.bf16.msra.mxu0 %v1554
        %1583 = vmatprep.subr.bf16.mxu0 0
        %1584 = vmatpush1.bf16.msra.mxu0 %v1553
        %1585 = vmatprep.subr.bf16.mxu0 0
        %1586 = vmatpush2.bf16.msra.mxu0 0
        %1587 = vmatprep.subr.bf16.mxu0 0
        %1588 = vmatpush2.bf16.msra.mxu0 0
        %1589 = vmatprep.subr.bf16.mxu0 0
        %1590 = vmatpush2.bf16.msra.mxu0 0
        %1591 = vmatprep.subr.bf16.mxu0 0
        %1592 = vmatpush2.bf16.msra.mxu0 0
        %1593 = vmatprep.subr.bf16.mxu0 0
        %1594 = vmatpush2.bf16.msra.mxu0 0
        %1595 = vmatprep.subr.bf16.mxu0 0
        %1596 = vmatpush2.bf16.msra.mxu0 0
        %1597 = vmatprep.subr.bf16.mxu0 0
        %1598 = vmatpush2.bf16.msra.mxu0 0
        %1599 = vmatprep.subr.bf16.mxu0 0
        %1600 = vmatpush2.bf16.msra.mxu0 0
        %1601 = vmatprep.mubr.bf16.mxu0 0
        %1602 = vmatmul.mubr.bf16.gmra.mxu0 %v1497
        %v1603 = vpop.f32.mrf.mxu0
        %v1604 = vadd.f32 %v1519, %v1603
        %v1605 = vpop.f32.mrf.mxu0
        %v1606 = vpop.f32.mrf.mxu0
        %v1607 = vadd.f32 %v1519, %v1606
        %v1608 = vpop.f32.mrf.mxu0
        %1609 = vdwg.mxu0
        %v1610 = vadd.f32 %v1365, %v1604
        %v1611 = vadd.f32 %v1366, %v1607
        %v1612 = vld [vmem:[%s15] sm:$0x1]
        %v1613 = vld [vmem:[%s16] sm:$0x1]
        %v1614 = vsel %vm616, %v1610, 0.0
        %1615 = vadd.xlane.f32.xlu0 %v1614
        %v1616 = vpop.xlane.xlu0 %1615
        %v1617 = vsel %vm616, %v1611, 0.0
        %1618 = vadd.xlane.f32.xlu0 %v1617
        %v1619 = vpop.xlane.xlu0 %1618
        %v1620 = vmul.f32 %v1616, %v623
        %v1621 = vmul.f32 %v1619, %v623
        %v1622 = vsub.f32 %v1610, %v1620
        %v1623 = vsub.f32 %v1611, %v1621
        %v1624 = vmul.f32 %v1622, %v1622
        %v1625 = vmul.f32 %v1623, %v1623
        %v1626 = vsel %vm616, %v1624, 0.0
        %1627 = vadd.xlane.f32.xlu0 %v1626
        %v1628 = vpop.xlane.xlu0 %1627
        %v1629 = vsel %vm616, %v1625, 0.0
        %1630 = vadd.xlane.f32.xlu0 %v1629
        %v1631 = vpop.xlane.xlu0 %1630
        %v1632 = vmul.f32 %v1628, %v623
        %v1633 = vmul.f32 %v1631, %v623
        %v1634 = vadd.f32 %v1632, 1e-05
        %v1635 = vadd.f32 %v1633, 1e-05
        %v1636 = vrsqrt.pop %v1634
        %v1637 = vrsqrt.pop %v1635
        %v1638 = vmul.f32 %v1622, %v1636
        %v1639 = vmul.f32 %v1623, %v1637
        %v1641 = vlaneseq
        %v1642 = vshrl.u32 %v1641, 7
        %v1643 = vsub.s32 0, %v1642
        %v1644 = vrot.slane %v1612, %v1643
        %v1646 = vmul.f32 %v1638, %v1644
        %v1647 = vmul.f32 %v1639, %v1644
        %v1649 = vlaneseq
        %v1650 = vshrl.u32 %v1649, 7
        %v1651 = vsub.s32 0, %v1650
        %v1652 = vrot.slane %v1613, %v1651
        %v1654 = vadd.f32 %v1646, %v1652
        %v1655 = vadd.f32 %v1647, %v1652
        %v1656 = vsel %vm616, %v1654, 0.0
        %v1657 = vsel %vm616, %v1655, 0.0
        %v1658 = vadd.f32 %v1656, %v1657
        %v1659 = vrot.slane %v1658, 4
        %v1660 = vadd.f32 %v1658, %v1659
        %v1661 = vrot.slane %v1660, 2
        %v1662 = vadd.f32 %v1660, %v1661
        %v1663 = vrot.slane %v1662, 1
        %v1664 = vadd.f32 %v1662, %v1663
        %v1665 = vrcp.pop 16.0
        %v1666 = vmul.f32 %v1664, %v1665
        %vm1667 = vcmask 253952
        %1668 = vst.msk [vmem:[%s540] sm:$0x1] %vm1667, %v1666
        %s1669 = sand.u32 %s401, 1
        %s1670 = scalar_lea.sflag [#allocation4], %s1669
        %s1671 = sand.u32 %s401, 1
        %s1672 = scalar_lea.vmem [#allocation3], %s1671
        // Predicated region
        $region89: #{mast_forward.1} parent=87 // pred_check
          %p1673 = pneg %p411
        $region90: #{mast_forward.1} parent=87 // pred_check_branch
          %1675 = sbr.rel (%p1673) target = $region92
        $region91: #{mast_forward.1} parent=87 // pred_region
          %s1677 = ssub.s32 16, 16
          %1678 = vsyncadd %s1670, %s1677
          %s1679 = smul.addr %s31, 16
          %s1680 = scalar_lea.hbm %s17, %s1679
          %s1682 = sshll.u32 %s1672, 4
          %s1683 = int_to_ptr.vmem [resolvable:$true] %s1682
          %1685 = dma.vmem_to_hbm [thread:$0]  %s1683, 16, %s1680, %s1670
        $region92: #{mast_forward.1} parent=87 // pred_fallthru
          _
      $region88: #{mast_forward.1} parent=5 // pred_fallthru
        _
      %p1686 = scmp.le.s32.totalorder 2, %s26
      // Predicated region
      $region93: #{mast_forward.1} parent=5 // pred_check
        %p1687 = pneg %p1686
      $region94: #{mast_forward.1} parent=5 // pred_check_branch
        %1689 = sbr.rel (%p1687) target = $region96
      $region95: #{mast_forward.1} parent=5 // pred_region
        %s1690 = ssub.s32 %s26, 2
        // Predicated region
        $region97: #{mast_forward.1} parent=95 // pred_check
          %p1691 = pneg %p417
        $region98: #{mast_forward.1} parent=95 // pred_check_branch
          %1693 = sbr.rel (%p1691) target = $region100
        $region99: #{mast_forward.1} parent=95 // pred_region
          %s1694 = sand.u32 %s402, 1
          %s1695 = scalar_lea.sflag [#allocation4], %s1694
          %s1696 = sand.u32 %s402, 1
          %s1697 = scalar_lea.vmem [#allocation3], %s1696
          %1698 = dma.done %s1695, 16
        $region100: #{mast_forward.1} parent=95 // pred_fallthru
          _
      $region96: #{mast_forward.1} parent=5 // pred_fallthru
        _
    $region6: #{mast_forward.1} parent=1 // loop_footer
      %s30 = sadd.s32 1, %s26
    $region7: #{mast_forward.1} parent=1 // loop_footer_branch
      %25 = sbr.rel target = $region3
    $region8: #{mast_forward.1} parent=1 // loop_exit
      _
    %1699 = vsyncpa [#allocation4], 1
    %s1700 = scalar_lea.sflag [#allocation4], 1
    %1701 = vsyncpa %s1700, 1

</llo_original>
